<compile_context>
chip_gen: v7x
topology: tpu7x:2x2x1
jax: 0.10.0
libtpu: 0.0.40
codegen_flags: <defaults>
</compile_context>

<pallas_src>
import functools

import jax
import jax.numpy as jnp
from jax.experimental import pallas as pl
from jax.experimental.pallas import tpu as pltpu


def _round_up(n, m):
    return ((n + m - 1) // m) * m


def _mlp_kernel(x_ref,
                w1, b1, w2, b2, w3, b3, w4, b4, w5, b5, w6, b6,
                out_ref):
    """6x (Linear + ReLU). Weights bf16 (MXU-native), accumulation in f32."""
    # In-kernel f32 -> bf16 cast: x is read from HBM as f32 exactly once instead
    # of a wrapper-side cast writing + re-reading a bf16 copy.
    h = x_ref[...].astype(jnp.bfloat16)                  # (TB, 1024)

    def lin_relu_bf16(h, w_ref, b_ref):
        y = jnp.dot(h, w_ref[...], preferred_element_type=jnp.float32) + b_ref[...]
        return jnp.maximum(y, 0.0).astype(jnp.bfloat16)

    h = lin_relu_bf16(h, w1, b1)   # 1024 -> 512
    h = lin_relu_bf16(h, w2, b2)   # 512  -> 128
    h = lin_relu_bf16(h, w3, b3)   # 128  -> 128 (orig 64, zero-padded)
    h = lin_relu_bf16(h, w4, b4)   # 128  -> 128 (orig 32, zero-padded)
    h = lin_relu_bf16(h, w5, b5)   # 128  -> 128 (orig 16, zero-padded)
    # Final layer: f32 accumulate, ReLU, then lane-dense bf16 store.
    y = jnp.dot(h, w6[...], preferred_element_type=jnp.float32) + b6[...]
    out_ref[...] = jnp.maximum(y, 0.0).astype(out_ref.dtype)


def init_params(key, n_classes):
    """nn.Linear default-style init (uniform +/- 1/sqrt(fan_in)).
    Weights stored transposed (in_features, out_features) for y = x @ W + b."""
    dims = [1024, 512, 128, 64, 32, 16, n_classes]
    params = []
    for i in range(len(dims) - 1):
        fan_in, fan_out = dims[i], dims[i + 1]
        key, kw, kb = jax.random.split(key, 3)
        bound = 1.0 / (fan_in ** 0.5)
        w = jax.random.uniform(kw, (fan_in, fan_out), jnp.float32, -bound, bound)
        b = jax.random.uniform(kb, (1, fan_out), jnp.float32, -bound, bound)
        params.append((w, b))
    return params


def prepare_params(params):
    """Pad each layer's fan_in/fan_out up to a multiple of 128 (lane-dense) and
    cast weights to bf16.  Zero-padded weight columns + zero bias + ReLU keep the
    padded activation lanes exactly zero, so results are unchanged."""
    prepped = []
    for (w, b) in params:
        fi, fo = w.shape
        fi_p, fo_p = _round_up(fi, 128), _round_up(fo, 128)
        w_p = jnp.zeros((fi_p, fo_p), jnp.float32).at[:fi, :fo].set(w).astype(jnp.bfloat16)
        b_p = jnp.zeros((1, fo_p), jnp.float32).at[:, :fo].set(b)   # bias stays f32
        prepped.append((w_p, b_p))
    return prepped


@functools.partial(jax.jit, static_argnames=("n_classes",))
def cmodel_forward(x, padded_params, n_classes):
    """cModel.forward: flatten then block_2 MLP (every Linear followed by ReLU)."""
    B = x.shape[0]
    # Flatten only (zero-copy reshape); the bf16 cast happens inside the kernel.
    x_flat = x.reshape(B, -1).astype(jnp.float32)
    IN = x_flat.shape[1]
    assert IN == 1024, "cModel expects inputs that flatten to 1024 features"

    # Right-sized batch tile: <=1024 rows (fits every generation's VMEM with an
    # explicit 48 MiB limit), multiple of 16 (native bf16 (16,128) tiling), and
    # derived from cdiv(B, num_tiles) so per-tile padding is < 16 rows.
    TB_CAP = 1024
    num_tiles = pl.cdiv(B, TB_CAP)
    TB = _round_up(pl.cdiv(B, num_tiles), 16)
    B_pad = num_tiles * TB
    if B_pad != B:
        x_flat = jnp.pad(x_flat, ((0, B_pad - B), (0, 0)))

    OUT_P = padded_params[-1][0].shape[1]                 # 128 (padded n_classes)

    flat_params = []
    in_specs = [pl.BlockSpec((TB, IN), lambda i: (i, 0))]
    for (w, b) in padded_params:
        flat_params.extend([w, b])
        # Weights/biases: full-extent blocks with constant index_map -> stay
        # VMEM-resident across all batch-grid steps (no re-DMA per tile).
        # (Constant-index blocks cost ~1.3 MB of double-buffer slack; acceptable
        # under the 48 MiB budget, so pipeline_mode is left at the default.)
        in_specs.append(pl.BlockSpec(w.shape, lambda i: (0, 0)))
        in_specs.append(pl.BlockSpec(b.shape, lambda i: (0, 0)))
    out_specs = pl.BlockSpec((TB, OUT_P), lambda i: (i, 0))

    flops = 2 * B_pad * sum(w.shape[0] * w.shape[1] for (w, _) in padded_params)
    bytes_accessed = (
        x_flat.size * 4                                            # f32 input read
        + sum(w.size * 2 + b.size * 4 for (w, b) in padded_params)  # bf16 W, f32 b
        + B_pad * OUT_P * 2                                        # bf16 output
    )

    out = pl.pallas_call(
        _mlp_kernel,
        out_shape=jax.ShapeDtypeStruct((B_pad, OUT_P), jnp.bfloat16),
        grid=(num_tiles,),
        in_specs=in_specs,
        out_specs=out_specs,
        compiler_params=pltpu.CompilerParams(
            dimension_semantics=("parallel",),            # megacore-sharded batch axis
            vmem_limit_bytes=48 * 1024 * 1024,            # > v5e's 16 MiB scoped default,
        ),                                                #  < v7x's 64 MiB physical
        cost_estimate=pl.CostEstimate(
            flops=flops, transcendentals=0, bytes_accessed=bytes_accessed),
    )(x_flat, *flat_params)

    # Only n_classes lanes are real; cast the tiny slice back to f32 for callers.
    return out[:B, :n_classes].astype(jnp.float32)


def _reference_forward_f32(x, params):
    """Exact PyTorch-semantics (f32) reference."""
    h = x.reshape(x.shape[0], -1)
    for (w, b) in params:
        h = jnp.maximum(h @ w + b, 0.0)
    return h


def _reference_forward_bf16(x, params):
    """Reference mirroring the kernel's bf16-weight / f32-accumulate / bf16-store math."""
    h = x.reshape(x.shape[0], -1).astype(jnp.bfloat16)
    y = None
    for (w, b) in params:
        y = jnp.dot(h, w.astype(jnp.bfloat16),
                    preferred_element_type=jnp.float32) + b
        y = jnp.maximum(y, 0.0)
        h = y.astype(jnp.bfloat16)
    # Kernel stores the final activations in bf16 before the wrapper's f32 cast.
    return y.astype(jnp.bfloat16).astype(jnp.float32)


if __name__ == "__main__":
    key = jax.random.PRNGKey(0)
    k_in, k_param = jax.random.split(key)

    n_classes = 10
    B = 4
    # Input shaped like a PyTorch NCHW tensor that flattens to 1024 features.
    x = jax.random.normal(k_in, (B, 1, 32, 32), jnp.float32)

    params = init_params(k_param, n_classes)          # canonical f32 params
    padded_params = prepare_params(params)            # bf16, lane-dense-padded

    out = cmodel_forward(x, padded_params, n_classes)
    out = jax.block_until_ready(out)
    assert out.shape == (B, n_classes)

    # Tight check vs a reference using the same bf16 math as the kernel.
    ref_bf16 = _reference_forward_bf16(x, params)
    assert jnp.allclose(out, ref_bf16, atol=5e-3, rtol=5e-3), "mismatch vs bf16 reference"

    # Loose semantic sanity check vs the full-f32 PyTorch-equivalent reference
    # (bf16 weights/activations introduce ~0.5-2% relative error by design).
    ref_f32 = _reference_forward_f32(x, params)
    assert jnp.allclose(out, ref_f32, atol=5e-2, rtol=5e-2), "mismatch vs f32 reference"

    print("KERNEL_OK")
</pallas_src>

<mosaic_0001>
module attributes {stable_mosaic.version = 11 : i64} {
  func.func @_mlp_kernel(%arg0: i32, %arg1: memref<16x1024xf32, #tpu.memory_space<vmem>>, %arg2: memref<1024x512xbf16, #tpu.memory_space<vmem>>, %arg3: memref<1x512xf32, #tpu.memory_space<vmem>>, %arg4: memref<512x128xbf16, #tpu.memory_space<vmem>>, %arg5: memref<1x128xf32, #tpu.memory_space<vmem>>, %arg6: memref<128x128xbf16, #tpu.memory_space<vmem>>, %arg7: memref<1x128xf32, #tpu.memory_space<vmem>>, %arg8: memref<128x128xbf16, #tpu.memory_space<vmem>>, %arg9: memref<1x128xf32, #tpu.memory_space<vmem>>, %arg10: memref<128x128xbf16, #tpu.memory_space<vmem>>, %arg11: memref<1x128xf32, #tpu.memory_space<vmem>>, %arg12: memref<128x128xbf16, #tpu.memory_space<vmem>>, %arg13: memref<1x128xf32, #tpu.memory_space<vmem>>, %arg14: memref<16x128xbf16, #tpu.memory_space<vmem>>) attributes {dimension_semantics = [#tpu.dimension_semantics<parallel>], iteration_bounds = array<i64: 1>, scalar_prefetch = 0 : i64, scratch_operands = 0 : i64, tpu.core_type = #tpu.core_type<tc>, window_params = [{transform_indices = @transform_0, window_bounds = array<i64: 16, 1024>}, {pipeline_mode = #tpu.pipeline_mode<synchronous>, transform_indices = @transform_1, window_bounds = array<i64: 1024, 512>}, {pipeline_mode = #tpu.pipeline_mode<synchronous>, transform_indices = @transform_2, window_bounds = array<i64: 1, 512>}, {pipeline_mode = #tpu.pipeline_mode<synchronous>, transform_indices = @transform_3, window_bounds = array<i64: 512, 128>}, {pipeline_mode = #tpu.pipeline_mode<synchronous>, transform_indices = @transform_4, window_bounds = array<i64: 1, 128>}, {pipeline_mode = #tpu.pipeline_mode<synchronous>, transform_indices = @transform_5, window_bounds = array<i64: 128, 128>}, {pipeline_mode = #tpu.pipeline_mode<synchronous>, transform_indices = @transform_6, window_bounds = array<i64: 1, 128>}, {pipeline_mode = #tpu.pipeline_mode<synchronous>, transform_indices = @transform_7, window_bounds = array<i64: 128, 128>}, {pipeline_mode = #tpu.pipeline_mode<synchronous>, transform_indices = @transform_8, window_bounds = array<i64: 1, 128>}, {pipeline_mode = #tpu.pipeline_mode<synchronous>, transform_indices = @transform_9, window_bounds = array<i64: 128, 128>}, {pipeline_mode = #tpu.pipeline_mode<synchronous>, transform_indices = @transform_10, window_bounds = array<i64: 1, 128>}, {pipeline_mode = #tpu.pipeline_mode<synchronous>, transform_indices = @transform_11, window_bounds = array<i64: 128, 128>}, {pipeline_mode = #tpu.pipeline_mode<synchronous>, transform_indices = @transform_12, window_bounds = array<i64: 1, 128>}, {transform_indices = @transform_13, window_bounds = array<i64: 16, 128>}]} {
    %c0 = arith.constant 0 : index
    %c0_0 = arith.constant 0 : index
    %0 = vector.load %arg1[%c0, %c0_0] : memref<16x1024xf32, #tpu.memory_space<vmem>>, vector<16x1024xf32>
    %1 = arith.truncf %0 : vector<16x1024xf32> to vector<16x1024xbf16>
    %c0_1 = arith.constant 0 : index
    %c0_2 = arith.constant 0 : index
    %2 = vector.load %arg2[%c0_1, %c0_2] : memref<1024x512xbf16, #tpu.memory_space<vmem>>, vector<1024x512xbf16>
    %cst = arith.constant dense<0.000000e+00> : vector<16x512xf32>
    %3 = tpu.matmul %1, %2, %cst {dimension_numbers = #tpu.dot_dimension_numbers<[1], [0], [0], [1], [0, 0, 1, 1], [], []>} : vector<16x1024xbf16>, vector<1024x512xbf16>, vector<16x512xf32> -> vector<16x512xf32>
    %c0_3 = arith.constant 0 : index
    %c0_4 = arith.constant 0 : index
    %4 = vector.load %arg3[%c0_3, %c0_4] : memref<1x512xf32, #tpu.memory_space<vmem>>, vector<1x512xf32>
    %5 = vector.broadcast %4 : vector<1x512xf32> to vector<16x512xf32>
    %6 = arith.addf %3, %5 : vector<16x512xf32>
    %cst_5 = arith.constant 0.000000e+00 : f32
    %7 = vector.broadcast %cst_5 : f32 to vector<16x512xf32>
    %8 = arith.maximumf %6, %7 : vector<16x512xf32>
    %9 = arith.truncf %8 : vector<16x512xf32> to vector<16x512xbf16>
    %c0_6 = arith.constant 0 : index
    %c0_7 = arith.constant 0 : index
    %10 = vector.load %arg4[%c0_6, %c0_7] : memref<512x128xbf16, #tpu.memory_space<vmem>>, vector<512x128xbf16>
    %cst_8 = arith.constant dense<0.000000e+00> : vector<16x128xf32>
    %11 = tpu.matmul %9, %10, %cst_8 {dimension_numbers = #tpu.dot_dimension_numbers<[1], [0], [0], [1], [0, 0, 1, 1], [], []>} : vector<16x512xbf16>, vector<512x128xbf16>, vector<16x128xf32> -> vector<16x128xf32>
    %c0_9 = arith.constant 0 : index
    %c0_10 = arith.constant 0 : index
    %12 = vector.load %arg5[%c0_9, %c0_10] : memref<1x128xf32, #tpu.memory_space<vmem>>, vector<1x128xf32>
    %13 = vector.broadcast %12 : vector<1x128xf32> to vector<16x128xf32>
    %14 = arith.addf %11, %13 : vector<16x128xf32>
    %cst_11 = arith.constant 0.000000e+00 : f32
    %15 = vector.broadcast %cst_11 : f32 to vector<16x128xf32>
    %16 = arith.maximumf %14, %15 : vector<16x128xf32>
    %17 = arith.truncf %16 : vector<16x128xf32> to vector<16x128xbf16>
    %c0_12 = arith.constant 0 : index
    %c0_13 = arith.constant 0 : index
    %18 = vector.load %arg6[%c0_12, %c0_13] : memref<128x128xbf16, #tpu.memory_space<vmem>>, vector<128x128xbf16>
    %cst_14 = arith.constant dense<0.000000e+00> : vector<16x128xf32>
    %19 = tpu.matmul %17, %18, %cst_14 {dimension_numbers = #tpu.dot_dimension_numbers<[1], [0], [0], [1], [0, 0, 1, 1], [], []>} : vector<16x128xbf16>, vector<128x128xbf16>, vector<16x128xf32> -> vector<16x128xf32>
    %c0_15 = arith.constant 0 : index
    %c0_16 = arith.constant 0 : index
    %20 = vector.load %arg7[%c0_15, %c0_16] : memref<1x128xf32, #tpu.memory_space<vmem>>, vector<1x128xf32>
    %21 = vector.broadcast %20 : vector<1x128xf32> to vector<16x128xf32>
    %22 = arith.addf %19, %21 : vector<16x128xf32>
    %cst_17 = arith.constant 0.000000e+00 : f32
    %23 = vector.broadcast %cst_17 : f32 to vector<16x128xf32>
    %24 = arith.maximumf %22, %23 : vector<16x128xf32>
    %25 = arith.truncf %24 : vector<16x128xf32> to vector<16x128xbf16>
    %c0_18 = arith.constant 0 : index
    %c0_19 = arith.constant 0 : index
    %26 = vector.load %arg8[%c0_18, %c0_19] : memref<128x128xbf16, #tpu.memory_space<vmem>>, vector<128x128xbf16>
    %cst_20 = arith.constant dense<0.000000e+00> : vector<16x128xf32>
    %27 = tpu.matmul %25, %26, %cst_20 {dimension_numbers = #tpu.dot_dimension_numbers<[1], [0], [0], [1], [0, 0, 1, 1], [], []>} : vector<16x128xbf16>, vector<128x128xbf16>, vector<16x128xf32> -> vector<16x128xf32>
    %c0_21 = arith.constant 0 : index
    %c0_22 = arith.constant 0 : index
    %28 = vector.load %arg9[%c0_21, %c0_22] : memref<1x128xf32, #tpu.memory_space<vmem>>, vector<1x128xf32>
    %29 = vector.broadcast %28 : vector<1x128xf32> to vector<16x128xf32>
    %30 = arith.addf %27, %29 : vector<16x128xf32>
    %cst_23 = arith.constant 0.000000e+00 : f32
    %31 = vector.broadcast %cst_23 : f32 to vector<16x128xf32>
    %32 = arith.maximumf %30, %31 : vector<16x128xf32>
    %33 = arith.truncf %32 : vector<16x128xf32> to vector<16x128xbf16>
    %c0_24 = arith.constant 0 : index
    %c0_25 = arith.constant 0 : index
    %34 = vector.load %arg10[%c0_24, %c0_25] : memref<128x128xbf16, #tpu.memory_space<vmem>>, vector<128x128xbf16>
    %cst_26 = arith.constant dense<0.000000e+00> : vector<16x128xf32>
    %35 = tpu.matmul %33, %34, %cst_26 {dimension_numbers = #tpu.dot_dimension_numbers<[1], [0], [0], [1], [0, 0, 1, 1], [], []>} : vector<16x128xbf16>, vector<128x128xbf16>, vector<16x128xf32> -> vector<16x128xf32>
    %c0_27 = arith.constant 0 : index
    %c0_28 = arith.constant 0 : index
    %36 = vector.load %arg11[%c0_27, %c0_28] : memref<1x128xf32, #tpu.memory_space<vmem>>, vector<1x128xf32>
    %37 = vector.broadcast %36 : vector<1x128xf32> to vector<16x128xf32>
    %38 = arith.addf %35, %37 : vector<16x128xf32>
    %cst_29 = arith.constant 0.000000e+00 : f32
    %39 = vector.broadcast %cst_29 : f32 to vector<16x128xf32>
    %40 = arith.maximumf %38, %39 : vector<16x128xf32>
    %41 = arith.truncf %40 : vector<16x128xf32> to vector<16x128xbf16>
    %c0_30 = arith.constant 0 : index
    %c0_31 = arith.constant 0 : index
    %42 = vector.load %arg12[%c0_30, %c0_31] : memref<128x128xbf16, #tpu.memory_space<vmem>>, vector<128x128xbf16>
    %cst_32 = arith.constant dense<0.000000e+00> : vector<16x128xf32>
    %43 = tpu.matmul %41, %42, %cst_32 {dimension_numbers = #tpu.dot_dimension_numbers<[1], [0], [0], [1], [0, 0, 1, 1], [], []>} : vector<16x128xbf16>, vector<128x128xbf16>, vector<16x128xf32> -> vector<16x128xf32>
    %c0_33 = arith.constant 0 : index
    %c0_34 = arith.constant 0 : index
    %44 = vector.load %arg13[%c0_33, %c0_34] : memref<1x128xf32, #tpu.memory_space<vmem>>, vector<1x128xf32>
    %45 = vector.broadcast %44 : vector<1x128xf32> to vector<16x128xf32>
    %46 = arith.addf %43, %45 : vector<16x128xf32>
    %cst_35 = arith.constant 0.000000e+00 : f32
    %47 = vector.broadcast %cst_35 : f32 to vector<16x128xf32>
    %48 = arith.maximumf %46, %47 : vector<16x128xf32>
    %49 = arith.truncf %48 : vector<16x128xf32> to vector<16x128xbf16>
    %c0_36 = arith.constant 0 : index
    %c0_37 = arith.constant 0 : index
    %50 = vector.load %arg14[%c0_36, %c0_37] : memref<16x128xbf16, #tpu.memory_space<vmem>>, vector<16x128xbf16>
    tpu.vector_store %arg14[%c0_36, %c0_37], %49 {strides = array<i32>} : memref<16x128xbf16, #tpu.memory_space<vmem>>, vector<16x128xbf16>,
    return
  }
  func.func @transform_0(%arg0: i32) -> (i32, i32) {
    %c0_i32 = arith.constant 0 : i32
    %c0_i32_0 = arith.constant 0 : i32
    return %arg0, %c0_i32 : i32, i32
  }
  func.func @transform_1(%arg0: i32) -> (i32, i32) {
    %c0_i32 = arith.constant 0 : i32
    %c0_i32_0 = arith.constant 0 : i32
    %c0_i32_1 = arith.constant 0 : i32
    return %c0_i32, %c0_i32_0 : i32, i32
  }
  func.func @transform_2(%arg0: i32) -> (i32, i32) {
    %c0_i32 = arith.constant 0 : i32
    %c0_i32_0 = arith.constant 0 : i32
    %c0_i32_1 = arith.constant 0 : i32
    return %c0_i32, %c0_i32_0 : i32, i32
  }
  func.func @transform_3(%arg0: i32) -> (i32, i32) {
    %c0_i32 = arith.constant 0 : i32
    %c0_i32_0 = arith.constant 0 : i32
    %c0_i32_1 = arith.constant 0 : i32
    return %c0_i32, %c0_i32_0 : i32, i32
  }
  func.func @transform_4(%arg0: i32) -> (i32, i32) {
    %c0_i32 = arith.constant 0 : i32
    %c0_i32_0 = arith.constant 0 : i32
    %c0_i32_1 = arith.constant 0 : i32
    return %c0_i32, %c0_i32_0 : i32, i32
  }
  func.func @transform_5(%arg0: i32) -> (i32, i32) {
    %c0_i32 = arith.constant 0 : i32
    %c0_i32_0 = arith.constant 0 : i32
    %c0_i32_1 = arith.constant 0 : i32
    return %c0_i32, %c0_i32_0 : i32, i32
  }
  func.func @transform_6(%arg0: i32) -> (i32, i32) {
    %c0_i32 = arith.constant 0 : i32
    %c0_i32_0 = arith.constant 0 : i32
    %c0_i32_1 = arith.constant 0 : i32
    return %c0_i32, %c0_i32_0 : i32, i32
  }
  func.func @transform_7(%arg0: i32) -> (i32, i32) {
    %c0_i32 = arith.constant 0 : i32
    %c0_i32_0 = arith.constant 0 : i32
    %c0_i32_1 = arith.constant 0 : i32
    return %c0_i32, %c0_i32_0 : i32, i32
  }
  func.func @transform_8(%arg0: i32) -> (i32, i32) {
    %c0_i32 = arith.constant 0 : i32
    %c0_i32_0 = arith.constant 0 : i32
    %c0_i32_1 = arith.constant 0 : i32
    return %c0_i32, %c0_i32_0 : i32, i32
  }
  func.func @transform_9(%arg0: i32) -> (i32, i32) {
    %c0_i32 = arith.constant 0 : i32
    %c0_i32_0 = arith.constant 0 : i32
    %c0_i32_1 = arith.constant 0 : i32
    return %c0_i32, %c0_i32_0 : i32, i32
  }
  func.func @transform_10(%arg0: i32) -> (i32, i32) {
    %c0_i32 = arith.constant 0 : i32
    %c0_i32_0 = arith.constant 0 : i32
    %c0_i32_1 = arith.constant 0 : i32
    return %c0_i32, %c0_i32_0 : i32, i32
  }
  func.func @transform_11(%arg0: i32) -> (i32, i32) {
    %c0_i32 = arith.constant 0 : i32
    %c0_i32_0 = arith.constant 0 : i32
    %c0_i32_1 = arith.constant 0 : i32
    return %c0_i32, %c0_i32_0 : i32, i32
  }
  func.func @transform_12(%arg0: i32) -> (i32, i32) {
    %c0_i32 = arith.constant 0 : i32
    %c0_i32_0 = arith.constant 0 : i32
    %c0_i32_1 = arith.constant 0 : i32
    return %c0_i32, %c0_i32_0 : i32, i32
  }
  func.func @transform_13(%arg0: i32) -> (i32, i32) {
    %c0_i32 = arith.constant 0 : i32
    %c0_i32_0 = arith.constant 0 : i32
    return %arg0, %c0_i32 : i32, i32
  }
}

</mosaic_0001>

<llo_original>
// kernel: cmodel_forward.1
$region0: #{cmodel_forward.1}
  #allocation0 [shape = 'u32[]', space=smem, size = 0x4, offset = 0x4, fixed_abs, tag = 'smem constant byte address 0x4 - core index']
  #allocation1 [shape = 'u32[144,128]{1,0:T(1,128)}', space=vmem, size = 0x12000, scoped, tag = 'internal scratch']
  %s0 = inlined_call_operand.vmem [shape: f32[16,1024], index: 0, kind: input, shape index: {}]
  %s1 = inlined_call_operand.hbm [shape: bf16[1024,512], index: 1, kind: input, shape index: {}]
  %s2 = inlined_call_operand.vmem [shape: f32[1,512], index: 2, kind: input, shape index: {}]
  %s3 = inlined_call_operand.vmem [shape: bf16[512,128], index: 3, kind: input, shape index: {}]
  %s4 = inlined_call_operand.vmem [shape: f32[1,128], index: 4, kind: input, shape index: {}]
  %s5 = inlined_call_operand.vmem [shape: bf16[128,128], index: 5, kind: input, shape index: {}]
  %s6 = inlined_call_operand.vmem [shape: f32[1,128], index: 6, kind: input, shape index: {}]
  %s7 = inlined_call_operand.hbm [shape: bf16[128,128], index: 7, kind: input, shape index: {}]
  %s8 = inlined_call_operand.vmem [shape: f32[1,128], index: 8, kind: input, shape index: {}]
  %s9 = inlined_call_operand.hbm [shape: bf16[128,128], index: 9, kind: input, shape index: {}]
  %s10 = inlined_call_operand.vmem [shape: f32[1,128], index: 10, kind: input, shape index: {}]
  %s11 = inlined_call_operand.hbm [shape: bf16[128,128], index: 11, kind: input, shape index: {}]
  %s12 = inlined_call_operand.vmem [shape: f32[1,128], index: 12, kind: input, shape index: {}]
  %s13 = inlined_call_operand.vmem [shape: bf16[16,128], index: 13, kind: output, shape index: {}]
  %s14 = sld [smem:[#allocation0]]
  $region78: #{cmodel_forward.1} parent=0
    _
  %s16 = ssub.s32 1, %s14
  %s17 = scalar_select 0, %s16, %s14
  $region1: #{cmodel_forward.1} parent=0
    #allocation2 [shape = 'u8[1048576]{0}', space=vmem, size = 0x100000, scoped, tag = 'input window, operand 1, single buffered']
    #allocation3 [shape = 's32[1]{0}', space=sflag, size = 0x4, scoped, tag = 'scoped memory for cmodel_forward.1']
    #allocation4 [shape = 'u8[32768]{0}', space=vmem, size = 0x8000, scoped, tag = 'input window, operand 7, single buffered']
    #allocation5 [shape = 's32[1]{0}', space=sflag, size = 0x4, scoped, tag = 'scoped memory for cmodel_forward.1']
    #allocation6 [shape = 'u8[32768]{0}', space=vmem, size = 0x8000, scoped, tag = 'input window, operand 9, single buffered']
    #allocation7 [shape = 'u8[32768]{0}', space=vmem, size = 0x8000, scoped, tag = 'input window, operand 11, single buffered']
    #allocation8 [shape = 's32[1]{0}', space=sflag, size = 0x4, scoped, tag = 'scoped memory for cmodel_forward.1']
    %18 = vsyncpa [#allocation3], 0
    %19 = vsyncpa [#allocation5], 0
    %20 = vsyncpa [#allocation8], 0
    // Predicated region
    $region2: #{cmodel_forward.1} parent=1 // pred_check
      _
    $region3: #{cmodel_forward.1} parent=1 // pred_check_branch
      %22 = sbr.rel (0) target = $region5
    $region4: #{cmodel_forward.1} parent=1 // pred_region
      _
    $region5: #{cmodel_forward.1} parent=1 // pred_fallthru
      _
    // Predicated region
    $region6: #{cmodel_forward.1} parent=1 // pred_check
      _
    $region7: #{cmodel_forward.1} parent=1 // pred_check_branch
      %24 = sbr.rel (0) target = $region9
    $region8: #{cmodel_forward.1} parent=1 // pred_region
      %s26 = ssub.s32 32768, 32768
      %27 = vsyncadd [#allocation3], %s26
      %s28 = sshll.u32 [#allocation2], 4
      %s29 = int_to_ptr.vmem [resolvable:$true] %s28
      %34 = dma.hbm_to_vmem [thread:$0]  %s1, 32768, %s29, [#allocation3], 256, 256, 16
    $region9: #{cmodel_forward.1} parent=1 // pred_fallthru
      _
    // Predicated region
    $region10: #{cmodel_forward.1} parent=1 // pred_check
      _
    $region11: #{cmodel_forward.1} parent=1 // pred_check_branch
      %36 = sbr.rel (0) target = $region13
    $region12: #{cmodel_forward.1} parent=1 // pred_region
      _
    $region13: #{cmodel_forward.1} parent=1 // pred_fallthru
      _
    // Predicated region
    $region14: #{cmodel_forward.1} parent=1 // pred_check
      _
    $region15: #{cmodel_forward.1} parent=1 // pred_check_branch
      %38 = sbr.rel (0) target = $region17
    $region16: #{cmodel_forward.1} parent=1 // pred_region
      _
    $region17: #{cmodel_forward.1} parent=1 // pred_fallthru
      _
    // Predicated region
    $region18: #{cmodel_forward.1} parent=1 // pred_check
      _
    $region19: #{cmodel_forward.1} parent=1 // pred_check_branch
      %40 = sbr.rel (0) target = $region21
    $region20: #{cmodel_forward.1} parent=1 // pred_region
      _
    $region21: #{cmodel_forward.1} parent=1 // pred_fallthru
      _
    // Predicated region
    $region22: #{cmodel_forward.1} parent=1 // pred_check
      _
    $region23: #{cmodel_forward.1} parent=1 // pred_check_branch
      %42 = sbr.rel (0) target = $region25
    $region24: #{cmodel_forward.1} parent=1 // pred_region
      _
    $region25: #{cmodel_forward.1} parent=1 // pred_fallthru
      _
    // Predicated region
    $region26: #{cmodel_forward.1} parent=1 // pred_check
      _
    $region27: #{cmodel_forward.1} parent=1 // pred_check_branch
      %44 = sbr.rel (0) target = $region29
    $region28: #{cmodel_forward.1} parent=1 // pred_region
      _
    $region29: #{cmodel_forward.1} parent=1 // pred_fallthru
      _
    // Predicated region
    $region30: #{cmodel_forward.1} parent=1 // pred_check
      _
    $region31: #{cmodel_forward.1} parent=1 // pred_check_branch
      %46 = sbr.rel (0) target = $region33
    $region32: #{cmodel_forward.1} parent=1 // pred_region
      %s48 = ssub.s32 1024, 1024
      %49 = vsyncadd [#allocation5], %s48
      %s50 = sshll.u32 [#allocation4], 4
      %s51 = int_to_ptr.vmem [resolvable:$true] %s50
      %56 = dma.hbm_to_vmem [thread:$0]  %s7, 1024, %s51, [#allocation5], 64, 64, 4
    $region33: #{cmodel_forward.1} parent=1 // pred_fallthru
      _
    // Predicated region
    $region34: #{cmodel_forward.1} parent=1 // pred_check
      _
    $region35: #{cmodel_forward.1} parent=1 // pred_check_branch
      %58 = sbr.rel (0) target = $region37
    $region36: #{cmodel_forward.1} parent=1 // pred_region
      _
    $region37: #{cmodel_forward.1} parent=1 // pred_fallthru
      _
    // Predicated region
    $region38: #{cmodel_forward.1} parent=1 // pred_check
      _
    $region39: #{cmodel_forward.1} parent=1 // pred_check_branch
      %60 = sbr.rel (0) target = $region41
    $region40: #{cmodel_forward.1} parent=1 // pred_region
      %s62 = ssub.s32 1024, 1024
      %63 = vsyncadd [#allocation5], %s62
      %s64 = sshll.u32 [#allocation6], 4
      %s65 = int_to_ptr.vmem [resolvable:$true] %s64
      %70 = dma.hbm_to_vmem [thread:$0]  %s9, 1024, %s65, [#allocation5], 64, 64, 4
    $region41: #{cmodel_forward.1} parent=1 // pred_fallthru
      _
    // Predicated region
    $region42: #{cmodel_forward.1} parent=1 // pred_check
      _
    $region43: #{cmodel_forward.1} parent=1 // pred_check_branch
      %72 = sbr.rel (0) target = $region45
    $region44: #{cmodel_forward.1} parent=1 // pred_region
      _
    $region45: #{cmodel_forward.1} parent=1 // pred_fallthru
      _
    // Predicated region
    $region46: #{cmodel_forward.1} parent=1 // pred_check
      _
    $region47: #{cmodel_forward.1} parent=1 // pred_check_branch
      %74 = sbr.rel (0) target = $region49
    $region48: #{cmodel_forward.1} parent=1 // pred_region
      %s76 = ssub.s32 1024, 1024
      %77 = vsyncadd [#allocation8], %s76
      %s78 = sshll.u32 [#allocation7], 4
      %s79 = int_to_ptr.vmem [resolvable:$true] %s78
      %84 = dma.hbm_to_vmem [thread:$0]  %s11, 1024, %s79, [#allocation8], 64, 64, 4
    $region49: #{cmodel_forward.1} parent=1 // pred_fallthru
      _
    // Predicated region
    $region50: #{cmodel_forward.1} parent=1 // pred_check
      _
    $region51: #{cmodel_forward.1} parent=1 // pred_check_branch
      %86 = sbr.rel (0) target = $region53
    $region52: #{cmodel_forward.1} parent=1 // pred_region
      _
    $region53: #{cmodel_forward.1} parent=1 // pred_fallthru
      _
    // Predicated region
    $region54: #{cmodel_forward.1} parent=1 // pred_check
      _
    $region55: #{cmodel_forward.1} parent=1 // pred_check_branch
      %88 = sbr.rel (0) target = $region57
    $region56: #{cmodel_forward.1} parent=1 // pred_region
      %89 = dma.done [#allocation3], 32768
    $region57: #{cmodel_forward.1} parent=1 // pred_fallthru
      _
    // Predicated region
    $region58: #{cmodel_forward.1} parent=1 // pred_check
      _
    $region59: #{cmodel_forward.1} parent=1 // pred_check_branch
      %91 = sbr.rel (0) target = $region61
    $region60: #{cmodel_forward.1} parent=1 // pred_region
      %92 = dma.done [#allocation5], 1024
    $region61: #{cmodel_forward.1} parent=1 // pred_fallthru
      _
    // Predicated region
    $region62: #{cmodel_forward.1} parent=1 // pred_check
      _
    $region63: #{cmodel_forward.1} parent=1 // pred_check_branch
      %94 = sbr.rel (0) target = $region65
    $region64: #{cmodel_forward.1} parent=1 // pred_region
      %95 = dma.done [#allocation5], 1024
    $region65: #{cmodel_forward.1} parent=1 // pred_fallthru
      _
    // Predicated region
    $region66: #{cmodel_forward.1} parent=1 // pred_check
      _
    $region67: #{cmodel_forward.1} parent=1 // pred_check_branch
      %97 = sbr.rel (0) target = $region69
    $region68: #{cmodel_forward.1} parent=1 // pred_region
      %98 = dma.done [#allocation8], 1024
    $region69: #{cmodel_forward.1} parent=1 // pred_fallthru
      _
    %v100 = vld [vmem:[%s0] sm:$0xff]
    %v101 = vld [vmem:[%s0 + $0x8] sm:$0xff]
    %v102 = vld [vmem:[%s0 + $0x10] sm:$0xff]
    %v103 = vld [vmem:[%s0 + $0x18] sm:$0xff]
    %v104 = vld [vmem:[%s0 + $0x20] sm:$0xff]
    %v105 = vld [vmem:[%s0 + $0x28] sm:$0xff]
    %v106 = vld [vmem:[%s0 + $0x30] sm:$0xff]
    %v107 = vld [vmem:[%s0 + $0x38] sm:$0xff]
    %v108 = vld [vmem:[%s0 + $0x40] sm:$0xff]
    %v109 = vld [vmem:[%s0 + $0x48] sm:$0xff]
    %v110 = vld [vmem:[%s0 + $0x50] sm:$0xff]
    %v111 = vld [vmem:[%s0 + $0x58] sm:$0xff]
    %v112 = vld [vmem:[%s0 + $0x60] sm:$0xff]
    %v113 = vld [vmem:[%s0 + $0x68] sm:$0xff]
    %v114 = vld [vmem:[%s0 + $0x70] sm:$0xff]
    %v115 = vld [vmem:[%s0 + $0x78] sm:$0xff]
    %v116 = vpack.c.bf16 %v108, %v100
    %v117 = vpack.c.bf16 %v109, %v101
    %v118 = vpack.c.bf16 %v110, %v102
    %v119 = vpack.c.bf16 %v111, %v103
    %v120 = vpack.c.bf16 %v112, %v104
    %v121 = vpack.c.bf16 %v113, %v105
    %v122 = vpack.c.bf16 %v114, %v106
    %v123 = vpack.c.bf16 %v115, %v107
    %v124 = vld [vmem:[#allocation2] sm:$0xff]
    %v125 = vld [vmem:[#allocation2 + $0x8] sm:$0xff]
    %v126 = vld [vmem:[#allocation2 + $0x10] sm:$0xff]
    %v127 = vld [vmem:[#allocation2 + $0x18] sm:$0xff]
    %v128 = vld [vmem:[#allocation2 + $0x20] sm:$0xff]
    %v129 = vld [vmem:[#allocation2 + $0x28] sm:$0xff]
    %v130 = vld [vmem:[#allocation2 + $0x30] sm:$0xff]
    %v131 = vld [vmem:[#allocation2 + $0x38] sm:$0xff]
    %v132 = vld [vmem:[#allocation2 + $0x40] sm:$0xff]
    %v133 = vld [vmem:[#allocation2 + $0x48] sm:$0xff]
    %v134 = vld [vmem:[#allocation2 + $0x50] sm:$0xff]
    %v135 = vld [vmem:[#allocation2 + $0x58] sm:$0xff]
    %v136 = vld [vmem:[#allocation2 + $0x60] sm:$0xff]
    %v137 = vld [vmem:[#allocation2 + $0x68] sm:$0xff]
    %v138 = vld [vmem:[#allocation2 + $0x70] sm:$0xff]
    %v139 = vld [vmem:[#allocation2 + $0x78] sm:$0xff]
    %v140 = vld [vmem:[#allocation2 + $0x80] sm:$0xff]
    %v141 = vld [vmem:[#allocation2 + $0x88] sm:$0xff]
    %v142 = vld [vmem:[#allocation2 + $0x90] sm:$0xff]
    %v143 = vld [vmem:[#allocation2 + $0x98] sm:$0xff]
    %v144 = vld [vmem:[#allocation2 + $0xa0] sm:$0xff]
    %v145 = vld [vmem:[#allocation2 + $0xa8] sm:$0xff]
    %v146 = vld [vmem:[#allocation2 + $0xb0] sm:$0xff]
    %v147 = vld [vmem:[#allocation2 + $0xb8] sm:$0xff]
    %v148 = vld [vmem:[#allocation2 + $0xc0] sm:$0xff]
    %v149 = vld [vmem:[#allocation2 + $0xc8] sm:$0xff]
    %v150 = vld [vmem:[#allocation2 + $0xd0] sm:$0xff]
    %v151 = vld [vmem:[#allocation2 + $0xd8] sm:$0xff]
    %v152 = vld [vmem:[#allocation2 + $0xe0] sm:$0xff]
    %v153 = vld [vmem:[#allocation2 + $0xe8] sm:$0xff]
    %v154 = vld [vmem:[#allocation2 + $0xf0] sm:$0xff]
    %v155 = vld [vmem:[#allocation2 + $0xf8] sm:$0xff]
    %v156 = vld [vmem:[#allocation2 + $0x100] sm:$0xff]
    %v157 = vld [vmem:[#allocation2 + $0x108] sm:$0xff]
    %v158 = vld [vmem:[#allocation2 + $0x110] sm:$0xff]
    %v159 = vld [vmem:[#allocation2 + $0x118] sm:$0xff]
    %v160 = vld [vmem:[#allocation2 + $0x120] sm:$0xff]
    %v161 = vld [vmem:[#allocation2 + $0x128] sm:$0xff]
    %v162 = vld [vmem:[#allocation2 + $0x130] sm:$0xff]
    %v163 = vld [vmem:[#allocation2 + $0x138] sm:$0xff]
    %v164 = vld [vmem:[#allocation2 + $0x140] sm:$0xff]
    %v165 = vld [vmem:[#allocation2 + $0x148] sm:$0xff]
    %v166 = vld [vmem:[#allocation2 + $0x150] sm:$0xff]
    %v167 = vld [vmem:[#allocation2 + $0x158] sm:$0xff]
    %v168 = vld [vmem:[#allocation2 + $0x160] sm:$0xff]
    %v169 = vld [vmem:[#allocation2 + $0x168] sm:$0xff]
    %v170 = vld [vmem:[#allocation2 + $0x170] sm:$0xff]
    %v171 = vld [vmem:[#allocation2 + $0x178] sm:$0xff]
    %v172 = vld [vmem:[#allocation2 + $0x180] sm:$0xff]
    %v173 = vld [vmem:[#allocation2 + $0x188] sm:$0xff]
    %v174 = vld [vmem:[#allocation2 + $0x190] sm:$0xff]
    %v175 = vld [vmem:[#allocation2 + $0x198] sm:$0xff]
    %v176 = vld [vmem:[#allocation2 + $0x1a0] sm:$0xff]
    %v177 = vld [vmem:[#allocation2 + $0x1a8] sm:$0xff]
    %v178 = vld [vmem:[#allocation2 + $0x1b0] sm:$0xff]
    %v179 = vld [vmem:[#allocation2 + $0x1b8] sm:$0xff]
    %v180 = vld [vmem:[#allocation2 + $0x1c0] sm:$0xff]
    %v181 = vld [vmem:[#allocation2 + $0x1c8] sm:$0xff]
    %v182 = vld [vmem:[#allocation2 + $0x1d0] sm:$0xff]
    %v183 = vld [vmem:[#allocation2 + $0x1d8] sm:$0xff]
    %v184 = vld [vmem:[#allocation2 + $0x1e0] sm:$0xff]
    %v185 = vld [vmem:[#allocation2 + $0x1e8] sm:$0xff]
    %v186 = vld [vmem:[#allocation2 + $0x1f0] sm:$0xff]
    %v187 = vld [vmem:[#allocation2 + $0x1f8] sm:$0xff]
    %v188 = vld [vmem:[#allocation2 + $0x200] sm:$0xff]
    %v189 = vld [vmem:[#allocation2 + $0x208] sm:$0xff]
    %v190 = vld [vmem:[#allocation2 + $0x210] sm:$0xff]
    %v191 = vld [vmem:[#allocation2 + $0x218] sm:$0xff]
    %v192 = vld [vmem:[#allocation2 + $0x220] sm:$0xff]
    %v193 = vld [vmem:[#allocation2 + $0x228] sm:$0xff]
    %v194 = vld [vmem:[#allocation2 + $0x230] sm:$0xff]
    %v195 = vld [vmem:[#allocation2 + $0x238] sm:$0xff]
    %v196 = vld [vmem:[#allocation2 + $0x240] sm:$0xff]
    %v197 = vld [vmem:[#allocation2 + $0x248] sm:$0xff]
    %v198 = vld [vmem:[#allocation2 + $0x250] sm:$0xff]
    %v199 = vld [vmem:[#allocation2 + $0x258] sm:$0xff]
    %v200 = vld [vmem:[#allocation2 + $0x260] sm:$0xff]
    %v201 = vld [vmem:[#allocation2 + $0x268] sm:$0xff]
    %v202 = vld [vmem:[#allocation2 + $0x270] sm:$0xff]
    %v203 = vld [vmem:[#allocation2 + $0x278] sm:$0xff]
    %v204 = vld [vmem:[#allocation2 + $0x280] sm:$0xff]
    %v205 = vld [vmem:[#allocation2 + $0x288] sm:$0xff]
    %v206 = vld [vmem:[#allocation2 + $0x290] sm:$0xff]
    %v207 = vld [vmem:[#allocation2 + $0x298] sm:$0xff]
    %v208 = vld [vmem:[#allocation2 + $0x2a0] sm:$0xff]
    %v209 = vld [vmem:[#allocation2 + $0x2a8] sm:$0xff]
    %v210 = vld [vmem:[#allocation2 + $0x2b0] sm:$0xff]
    %v211 = vld [vmem:[#allocation2 + $0x2b8] sm:$0xff]
    %v212 = vld [vmem:[#allocation2 + $0x2c0] sm:$0xff]
    %v213 = vld [vmem:[#allocation2 + $0x2c8] sm:$0xff]
    %v214 = vld [vmem:[#allocation2 + $0x2d0] sm:$0xff]
    %v215 = vld [vmem:[#allocation2 + $0x2d8] sm:$0xff]
    %v216 = vld [vmem:[#allocation2 + $0x2e0] sm:$0xff]
    %v217 = vld [vmem:[#allocation2 + $0x2e8] sm:$0xff]
    %v218 = vld [vmem:[#allocation2 + $0x2f0] sm:$0xff]
    %v219 = vld [vmem:[#allocation2 + $0x2f8] sm:$0xff]
    %v220 = vld [vmem:[#allocation2 + $0x300] sm:$0xff]
    %v221 = vld [vmem:[#allocation2 + $0x308] sm:$0xff]
    %v222 = vld [vmem:[#allocation2 + $0x310] sm:$0xff]
    %v223 = vld [vmem:[#allocation2 + $0x318] sm:$0xff]
    %v224 = vld [vmem:[#allocation2 + $0x320] sm:$0xff]
    %v225 = vld [vmem:[#allocation2 + $0x328] sm:$0xff]
    %v226 = vld [vmem:[#allocation2 + $0x330] sm:$0xff]
    %v227 = vld [vmem:[#allocation2 + $0x338] sm:$0xff]
    %v228 = vld [vmem:[#allocation2 + $0x340] sm:$0xff]
    %v229 = vld [vmem:[#allocation2 + $0x348] sm:$0xff]
    %v230 = vld [vmem:[#allocation2 + $0x350] sm:$0xff]
    %v231 = vld [vmem:[#allocation2 + $0x358] sm:$0xff]
    %v232 = vld [vmem:[#allocation2 + $0x360] sm:$0xff]
    %v233 = vld [vmem:[#allocation2 + $0x368] sm:$0xff]
    %v234 = vld [vmem:[#allocation2 + $0x370] sm:$0xff]
    %v235 = vld [vmem:[#allocation2 + $0x378] sm:$0xff]
    %v236 = vld [vmem:[#allocation2 + $0x380] sm:$0xff]
    %v237 = vld [vmem:[#allocation2 + $0x388] sm:$0xff]
    %v238 = vld [vmem:[#allocation2 + $0x390] sm:$0xff]
    %v239 = vld [vmem:[#allocation2 + $0x398] sm:$0xff]
    %v240 = vld [vmem:[#allocation2 + $0x3a0] sm:$0xff]
    %v241 = vld [vmem:[#allocation2 + $0x3a8] sm:$0xff]
    %v242 = vld [vmem:[#allocation2 + $0x3b0] sm:$0xff]
    %v243 = vld [vmem:[#allocation2 + $0x3b8] sm:$0xff]
    %v244 = vld [vmem:[#allocation2 + $0x3c0] sm:$0xff]
    %v245 = vld [vmem:[#allocation2 + $0x3c8] sm:$0xff]
    %v246 = vld [vmem:[#allocation2 + $0x3d0] sm:$0xff]
    %v247 = vld [vmem:[#allocation2 + $0x3d8] sm:$0xff]
    %v248 = vld [vmem:[#allocation2 + $0x3e0] sm:$0xff]
    %v249 = vld [vmem:[#allocation2 + $0x3e8] sm:$0xff]
    %v250 = vld [vmem:[#allocation2 + $0x3f0] sm:$0xff]
    %v251 = vld [vmem:[#allocation2 + $0x3f8] sm:$0xff]
    %v252 = vld [vmem:[#allocation2 + $0x400] sm:$0xff]
    %v253 = vld [vmem:[#allocation2 + $0x408] sm:$0xff]
    %v254 = vld [vmem:[#allocation2 + $0x410] sm:$0xff]
    %v255 = vld [vmem:[#allocation2 + $0x418] sm:$0xff]
    %v256 = vld [vmem:[#allocation2 + $0x420] sm:$0xff]
    %v257 = vld [vmem:[#allocation2 + $0x428] sm:$0xff]
    %v258 = vld [vmem:[#allocation2 + $0x430] sm:$0xff]
    %v259 = vld [vmem:[#allocation2 + $0x438] sm:$0xff]
    %v260 = vld [vmem:[#allocation2 + $0x440] sm:$0xff]
    %v261 = vld [vmem:[#allocation2 + $0x448] sm:$0xff]
    %v262 = vld [vmem:[#allocation2 + $0x450] sm:$0xff]
    %v263 = vld [vmem:[#allocation2 + $0x458] sm:$0xff]
    %v264 = vld [vmem:[#allocation2 + $0x460] sm:$0xff]
    %v265 = vld [vmem:[#allocation2 + $0x468] sm:$0xff]
    %v266 = vld [vmem:[#allocation2 + $0x470] sm:$0xff]
    %v267 = vld [vmem:[#allocation2 + $0x478] sm:$0xff]
    %v268 = vld [vmem:[#allocation2 + $0x480] sm:$0xff]
    %v269 = vld [vmem:[#allocation2 + $0x488] sm:$0xff]
    %v270 = vld [vmem:[#allocation2 + $0x490] sm:$0xff]
    %v271 = vld [vmem:[#allocation2 + $0x498] sm:$0xff]
    %v272 = vld [vmem:[#allocation2 + $0x4a0] sm:$0xff]
    %v273 = vld [vmem:[#allocation2 + $0x4a8] sm:$0xff]
    %v274 = vld [vmem:[#allocation2 + $0x4b0] sm:$0xff]
    %v275 = vld [vmem:[#allocation2 + $0x4b8] sm:$0xff]
    %v276 = vld [vmem:[#allocation2 + $0x4c0] sm:$0xff]
    %v277 = vld [vmem:[#allocation2 + $0x4c8] sm:$0xff]
    %v278 = vld [vmem:[#allocation2 + $0x4d0] sm:$0xff]
    %v279 = vld [vmem:[#allocation2 + $0x4d8] sm:$0xff]
    %v280 = vld [vmem:[#allocation2 + $0x4e0] sm:$0xff]
    %v281 = vld [vmem:[#allocation2 + $0x4e8] sm:$0xff]
    %v282 = vld [vmem:[#allocation2 + $0x4f0] sm:$0xff]
    %v283 = vld [vmem:[#allocation2 + $0x4f8] sm:$0xff]
    %v284 = vld [vmem:[#allocation2 + $0x500] sm:$0xff]
    %v285 = vld [vmem:[#allocation2 + $0x508] sm:$0xff]
    %v286 = vld [vmem:[#allocation2 + $0x510] sm:$0xff]
    %v287 = vld [vmem:[#allocation2 + $0x518] sm:$0xff]
    %v288 = vld [vmem:[#allocation2 + $0x520] sm:$0xff]
    %v289 = vld [vmem:[#allocation2 + $0x528] sm:$0xff]
    %v290 = vld [vmem:[#allocation2 + $0x530] sm:$0xff]
    %v291 = vld [vmem:[#allocation2 + $0x538] sm:$0xff]
    %v292 = vld [vmem:[#allocation2 + $0x540] sm:$0xff]
    %v293 = vld [vmem:[#allocation2 + $0x548] sm:$0xff]
    %v294 = vld [vmem:[#allocation2 + $0x550] sm:$0xff]
    %v295 = vld [vmem:[#allocation2 + $0x558] sm:$0xff]
    %v296 = vld [vmem:[#allocation2 + $0x560] sm:$0xff]
    %v297 = vld [vmem:[#allocation2 + $0x568] sm:$0xff]
    %v298 = vld [vmem:[#allocation2 + $0x570] sm:$0xff]
    %v299 = vld [vmem:[#allocation2 + $0x578] sm:$0xff]
    %v300 = vld [vmem:[#allocation2 + $0x580] sm:$0xff]
    %v301 = vld [vmem:[#allocation2 + $0x588] sm:$0xff]
    %v302 = vld [vmem:[#allocation2 + $0x590] sm:$0xff]
    %v303 = vld [vmem:[#allocation2 + $0x598] sm:$0xff]
    %v304 = vld [vmem:[#allocation2 + $0x5a0] sm:$0xff]
    %v305 = vld [vmem:[#allocation2 + $0x5a8] sm:$0xff]
    %v306 = vld [vmem:[#allocation2 + $0x5b0] sm:$0xff]
    %v307 = vld [vmem:[#allocation2 + $0x5b8] sm:$0xff]
    %v308 = vld [vmem:[#allocation2 + $0x5c0] sm:$0xff]
    %v309 = vld [vmem:[#allocation2 + $0x5c8] sm:$0xff]
    %v310 = vld [vmem:[#allocation2 + $0x5d0] sm:$0xff]
    %v311 = vld [vmem:[#allocation2 + $0x5d8] sm:$0xff]
    %v312 = vld [vmem:[#allocation2 + $0x5e0] sm:$0xff]
    %v313 = vld [vmem:[#allocation2 + $0x5e8] sm:$0xff]
    %v314 = vld [vmem:[#allocation2 + $0x5f0] sm:$0xff]
    %v315 = vld [vmem:[#allocation2 + $0x5f8] sm:$0xff]
    %v316 = vld [vmem:[#allocation2 + $0x600] sm:$0xff]
    %v317 = vld [vmem:[#allocation2 + $0x608] sm:$0xff]
    %v318 = vld [vmem:[#allocation2 + $0x610] sm:$0xff]
    %v319 = vld [vmem:[#allocation2 + $0x618] sm:$0xff]
    %v320 = vld [vmem:[#allocation2 + $0x620] sm:$0xff]
    %v321 = vld [vmem:[#allocation2 + $0x628] sm:$0xff]
    %v322 = vld [vmem:[#allocation2 + $0x630] sm:$0xff]
    %v323 = vld [vmem:[#allocation2 + $0x638] sm:$0xff]
    %v324 = vld [vmem:[#allocation2 + $0x640] sm:$0xff]
    %v325 = vld [vmem:[#allocation2 + $0x648] sm:$0xff]
    %v326 = vld [vmem:[#allocation2 + $0x650] sm:$0xff]
    %v327 = vld [vmem:[#allocation2 + $0x658] sm:$0xff]
    %v328 = vld [vmem:[#allocation2 + $0x660] sm:$0xff]
    %v329 = vld [vmem:[#allocation2 + $0x668] sm:$0xff]
    %v330 = vld [vmem:[#allocation2 + $0x670] sm:$0xff]
    %v331 = vld [vmem:[#allocation2 + $0x678] sm:$0xff]
    %v332 = vld [vmem:[#allocation2 + $0x680] sm:$0xff]
    %v333 = vld [vmem:[#allocation2 + $0x688] sm:$0xff]
    %v334 = vld [vmem:[#allocation2 + $0x690] sm:$0xff]
    %v335 = vld [vmem:[#allocation2 + $0x698] sm:$0xff]
    %v336 = vld [vmem:[#allocation2 + $0x6a0] sm:$0xff]
    %v337 = vld [vmem:[#allocation2 + $0x6a8] sm:$0xff]
    %v338 = vld [vmem:[#allocation2 + $0x6b0] sm:$0xff]
    %v339 = vld [vmem:[#allocation2 + $0x6b8] sm:$0xff]
    %v340 = vld [vmem:[#allocation2 + $0x6c0] sm:$0xff]
    %v341 = vld [vmem:[#allocation2 + $0x6c8] sm:$0xff]
    %v342 = vld [vmem:[#allocation2 + $0x6d0] sm:$0xff]
    %v343 = vld [vmem:[#allocation2 + $0x6d8] sm:$0xff]
    %v344 = vld [vmem:[#allocation2 + $0x6e0] sm:$0xff]
    %v345 = vld [vmem:[#allocation2 + $0x6e8] sm:$0xff]
    %v346 = vld [vmem:[#allocation2 + $0x6f0] sm:$0xff]
    %v347 = vld [vmem:[#allocation2 + $0x6f8] sm:$0xff]
    %v348 = vld [vmem:[#allocation2 + $0x700] sm:$0xff]
    %v349 = vld [vmem:[#allocation2 + $0x708] sm:$0xff]
    %v350 = vld [vmem:[#allocation2 + $0x710] sm:$0xff]
    %v351 = vld [vmem:[#allocation2 + $0x718] sm:$0xff]
    %v352 = vld [vmem:[#allocation2 + $0x720] sm:$0xff]
    %v353 = vld [vmem:[#allocation2 + $0x728] sm:$0xff]
    %v354 = vld [vmem:[#allocation2 + $0x730] sm:$0xff]
    %v355 = vld [vmem:[#allocation2 + $0x738] sm:$0xff]
    %v356 = vld [vmem:[#allocation2 + $0x740] sm:$0xff]
    %v357 = vld [vmem:[#allocation2 + $0x748] sm:$0xff]
    %v358 = vld [vmem:[#allocation2 + $0x750] sm:$0xff]
    %v359 = vld [vmem:[#allocation2 + $0x758] sm:$0xff]
    %v360 = vld [vmem:[#allocation2 + $0x760] sm:$0xff]
    %v361 = vld [vmem:[#allocation2 + $0x768] sm:$0xff]
    %v362 = vld [vmem:[#allocation2 + $0x770] sm:$0xff]
    %v363 = vld [vmem:[#allocation2 + $0x778] sm:$0xff]
    %v364 = vld [vmem:[#allocation2 + $0x780] sm:$0xff]
    %v365 = vld [vmem:[#allocation2 + $0x788] sm:$0xff]
    %v366 = vld [vmem:[#allocation2 + $0x790] sm:$0xff]
    %v367 = vld [vmem:[#allocation2 + $0x798] sm:$0xff]
    %v368 = vld [vmem:[#allocation2 + $0x7a0] sm:$0xff]
    %v369 = vld [vmem:[#allocation2 + $0x7a8] sm:$0xff]
    %v370 = vld [vmem:[#allocation2 + $0x7b0] sm:$0xff]
    %v371 = vld [vmem:[#allocation2 + $0x7b8] sm:$0xff]
    %v372 = vld [vmem:[#allocation2 + $0x7c0] sm:$0xff]
    %v373 = vld [vmem:[#allocation2 + $0x7c8] sm:$0xff]
    %v374 = vld [vmem:[#allocation2 + $0x7d0] sm:$0xff]
    %v375 = vld [vmem:[#allocation2 + $0x7d8] sm:$0xff]
    %v376 = vld [vmem:[#allocation2 + $0x7e0] sm:$0xff]
    %v377 = vld [vmem:[#allocation2 + $0x7e8] sm:$0xff]
    %v378 = vld [vmem:[#allocation2 + $0x7f0] sm:$0xff]
    %v379 = vld [vmem:[#allocation2 + $0x7f8] sm:$0xff]
    %v380 = vld [vmem:[%s2] sm:$0xf]
    %v382 = vlaneseq
    %v383 = vshrl.u32 %v382, 7
    %v384 = vsub.s32 0, %v383
    %v385 = vrot.slane %v380, %v384
    %v386 = vlaneseq
    %v387 = vshrl.u32 %v386, 7
    %v388 = vsub.s32 1, %v387
    %v389 = vrot.slane %v380, %v388
    %v390 = vlaneseq
    %v391 = vshrl.u32 %v390, 7
    %v392 = vsub.s32 2, %v391
    %v393 = vrot.slane %v380, %v392
    %v394 = vlaneseq
    %v395 = vshrl.u32 %v394, 7
    %v396 = vsub.s32 3, %v395
    %v397 = vrot.slane %v380, %v396
    %v658 = vunpack.c.l.b16 %v124
    %v659 = vunpack.c.h.b16 %v124
    %v660 = vunpack.c.l.b16 %v125
    %v661 = vunpack.c.h.b16 %v125
    %v662 = vunpack.c.l.b16 %v126
    %v663 = vunpack.c.h.b16 %v126
    %v664 = vunpack.c.l.b16 %v127
    %v665 = vunpack.c.h.b16 %v127
    %v666 = vunpack.c.l.b16 %v128
    %v667 = vunpack.c.h.b16 %v128
    %v668 = vunpack.c.l.b16 %v129
    %v669 = vunpack.c.h.b16 %v129
    %v670 = vunpack.c.l.b16 %v130
    %v671 = vunpack.c.h.b16 %v130
    %v672 = vunpack.c.l.b16 %v131
    %v673 = vunpack.c.h.b16 %v131
    %v674 = vunpack.c.l.b16 %v132
    %v675 = vunpack.c.h.b16 %v132
    %v676 = vunpack.c.l.b16 %v133
    %v677 = vunpack.c.h.b16 %v133
    %v678 = vunpack.c.l.b16 %v134
    %v679 = vunpack.c.h.b16 %v134
    %v680 = vunpack.c.l.b16 %v135
    %v681 = vunpack.c.h.b16 %v135
    %v682 = vunpack.c.l.b16 %v136
    %v683 = vunpack.c.h.b16 %v136
    %v684 = vunpack.c.l.b16 %v137
    %v685 = vunpack.c.h.b16 %v137
    %v686 = vunpack.c.l.b16 %v138
    %v687 = vunpack.c.h.b16 %v138
    %v688 = vunpack.c.l.b16 %v139
    %v689 = vunpack.c.h.b16 %v139
    %v690 = vunpack.c.l.b16 %v140
    %v691 = vunpack.c.h.b16 %v140
    %v692 = vunpack.c.l.b16 %v141
    %v693 = vunpack.c.h.b16 %v141
    %v694 = vunpack.c.l.b16 %v142
    %v695 = vunpack.c.h.b16 %v142
    %v696 = vunpack.c.l.b16 %v143
    %v697 = vunpack.c.h.b16 %v143
    %v698 = vunpack.c.l.b16 %v144
    %v699 = vunpack.c.h.b16 %v144
    %v700 = vunpack.c.l.b16 %v145
    %v701 = vunpack.c.h.b16 %v145
    %v702 = vunpack.c.l.b16 %v146
    %v703 = vunpack.c.h.b16 %v146
    %v704 = vunpack.c.l.b16 %v147
    %v705 = vunpack.c.h.b16 %v147
    %v706 = vunpack.c.l.b16 %v148
    %v707 = vunpack.c.h.b16 %v148
    %v708 = vunpack.c.l.b16 %v149
    %v709 = vunpack.c.h.b16 %v149
    %v710 = vunpack.c.l.b16 %v150
    %v711 = vunpack.c.h.b16 %v150
    %v712 = vunpack.c.l.b16 %v151
    %v713 = vunpack.c.h.b16 %v151
    %v714 = vunpack.c.l.b16 %v152
    %v715 = vunpack.c.h.b16 %v152
    %v716 = vunpack.c.l.b16 %v153
    %v717 = vunpack.c.h.b16 %v153
    %v718 = vunpack.c.l.b16 %v154
    %v719 = vunpack.c.h.b16 %v154
    %v720 = vunpack.c.l.b16 %v155
    %v721 = vunpack.c.h.b16 %v155
    %v722 = vunpack.c.l.b16 %v156
    %v723 = vunpack.c.h.b16 %v156
    %v724 = vunpack.c.l.b16 %v157
    %v725 = vunpack.c.h.b16 %v157
    %v726 = vunpack.c.l.b16 %v158
    %v727 = vunpack.c.h.b16 %v158
    %v728 = vunpack.c.l.b16 %v159
    %v729 = vunpack.c.h.b16 %v159
    %v730 = vunpack.c.l.b16 %v160
    %v731 = vunpack.c.h.b16 %v160
    %v732 = vunpack.c.l.b16 %v161
    %v733 = vunpack.c.h.b16 %v161
    %v734 = vunpack.c.l.b16 %v162
    %v735 = vunpack.c.h.b16 %v162
    %v736 = vunpack.c.l.b16 %v163
    %v737 = vunpack.c.h.b16 %v163
    %v738 = vunpack.c.l.b16 %v164
    %v739 = vunpack.c.h.b16 %v164
    %v740 = vunpack.c.l.b16 %v165
    %v741 = vunpack.c.h.b16 %v165
    %v742 = vunpack.c.l.b16 %v166
    %v743 = vunpack.c.h.b16 %v166
    %v744 = vunpack.c.l.b16 %v167
    %v745 = vunpack.c.h.b16 %v167
    %v746 = vunpack.c.l.b16 %v168
    %v747 = vunpack.c.h.b16 %v168
    %v748 = vunpack.c.l.b16 %v169
    %v749 = vunpack.c.h.b16 %v169
    %v750 = vunpack.c.l.b16 %v170
    %v751 = vunpack.c.h.b16 %v170
    %v752 = vunpack.c.l.b16 %v171
    %v753 = vunpack.c.h.b16 %v171
    %v754 = vunpack.c.l.b16 %v172
    %v755 = vunpack.c.h.b16 %v172
    %v756 = vunpack.c.l.b16 %v173
    %v757 = vunpack.c.h.b16 %v173
    %v758 = vunpack.c.l.b16 %v174
    %v759 = vunpack.c.h.b16 %v174
    %v760 = vunpack.c.l.b16 %v175
    %v761 = vunpack.c.h.b16 %v175
    %v762 = vunpack.c.l.b16 %v176
    %v763 = vunpack.c.h.b16 %v176
    %v764 = vunpack.c.l.b16 %v177
    %v765 = vunpack.c.h.b16 %v177
    %v766 = vunpack.c.l.b16 %v178
    %v767 = vunpack.c.h.b16 %v178
    %v768 = vunpack.c.l.b16 %v179
    %v769 = vunpack.c.h.b16 %v179
    %v770 = vunpack.c.l.b16 %v180
    %v771 = vunpack.c.h.b16 %v180
    %v772 = vunpack.c.l.b16 %v181
    %v773 = vunpack.c.h.b16 %v181
    %v774 = vunpack.c.l.b16 %v182
    %v775 = vunpack.c.h.b16 %v182
    %v776 = vunpack.c.l.b16 %v183
    %v777 = vunpack.c.h.b16 %v183
    %v778 = vunpack.c.l.b16 %v184
    %v779 = vunpack.c.h.b16 %v184
    %v780 = vunpack.c.l.b16 %v185
    %v781 = vunpack.c.h.b16 %v185
    %v782 = vunpack.c.l.b16 %v186
    %v783 = vunpack.c.h.b16 %v186
    %v784 = vunpack.c.l.b16 %v187
    %v785 = vunpack.c.h.b16 %v187
    %v786 = vunpack.c.l.b16 %v188
    %v787 = vunpack.c.h.b16 %v188
    %v788 = vunpack.c.l.b16 %v189
    %v789 = vunpack.c.h.b16 %v189
    %v790 = vunpack.c.l.b16 %v190
    %v791 = vunpack.c.h.b16 %v190
    %v792 = vunpack.c.l.b16 %v191
    %v793 = vunpack.c.h.b16 %v191
    %v794 = vunpack.c.l.b16 %v192
    %v795 = vunpack.c.h.b16 %v192
    %v796 = vunpack.c.l.b16 %v193
    %v797 = vunpack.c.h.b16 %v193
    %v798 = vunpack.c.l.b16 %v194
    %v799 = vunpack.c.h.b16 %v194
    %v800 = vunpack.c.l.b16 %v195
    %v801 = vunpack.c.h.b16 %v195
    %v802 = vunpack.c.l.b16 %v196
    %v803 = vunpack.c.h.b16 %v196
    %v804 = vunpack.c.l.b16 %v197
    %v805 = vunpack.c.h.b16 %v197
    %v806 = vunpack.c.l.b16 %v198
    %v807 = vunpack.c.h.b16 %v198
    %v808 = vunpack.c.l.b16 %v199
    %v809 = vunpack.c.h.b16 %v199
    %v810 = vunpack.c.l.b16 %v200
    %v811 = vunpack.c.h.b16 %v200
    %v812 = vunpack.c.l.b16 %v201
    %v813 = vunpack.c.h.b16 %v201
    %v814 = vunpack.c.l.b16 %v202
    %v815 = vunpack.c.h.b16 %v202
    %v816 = vunpack.c.l.b16 %v203
    %v817 = vunpack.c.h.b16 %v203
    %v818 = vunpack.c.l.b16 %v204
    %v819 = vunpack.c.h.b16 %v204
    %v820 = vunpack.c.l.b16 %v205
    %v821 = vunpack.c.h.b16 %v205
    %v822 = vunpack.c.l.b16 %v206
    %v823 = vunpack.c.h.b16 %v206
    %v824 = vunpack.c.l.b16 %v207
    %v825 = vunpack.c.h.b16 %v207
    %v826 = vunpack.c.l.b16 %v208
    %v827 = vunpack.c.h.b16 %v208
    %v828 = vunpack.c.l.b16 %v209
    %v829 = vunpack.c.h.b16 %v209
    %v830 = vunpack.c.l.b16 %v210
    %v831 = vunpack.c.h.b16 %v210
    %v832 = vunpack.c.l.b16 %v211
    %v833 = vunpack.c.h.b16 %v211
    %v834 = vunpack.c.l.b16 %v212
    %v835 = vunpack.c.h.b16 %v212
    %v836 = vunpack.c.l.b16 %v213
    %v837 = vunpack.c.h.b16 %v213
    %v838 = vunpack.c.l.b16 %v214
    %v839 = vunpack.c.h.b16 %v214
    %v840 = vunpack.c.l.b16 %v215
    %v841 = vunpack.c.h.b16 %v215
    %v842 = vunpack.c.l.b16 %v216
    %v843 = vunpack.c.h.b16 %v216
    %v844 = vunpack.c.l.b16 %v217
    %v845 = vunpack.c.h.b16 %v217
    %v846 = vunpack.c.l.b16 %v218
    %v847 = vunpack.c.h.b16 %v218
    %v848 = vunpack.c.l.b16 %v219
    %v849 = vunpack.c.h.b16 %v219
    %v850 = vunpack.c.l.b16 %v220
    %v851 = vunpack.c.h.b16 %v220
    %v852 = vunpack.c.l.b16 %v221
    %v853 = vunpack.c.h.b16 %v221
    %v854 = vunpack.c.l.b16 %v222
    %v855 = vunpack.c.h.b16 %v222
    %v856 = vunpack.c.l.b16 %v223
    %v857 = vunpack.c.h.b16 %v223
    %v858 = vunpack.c.l.b16 %v224
    %v859 = vunpack.c.h.b16 %v224
    %v860 = vunpack.c.l.b16 %v225
    %v861 = vunpack.c.h.b16 %v225
    %v862 = vunpack.c.l.b16 %v226
    %v863 = vunpack.c.h.b16 %v226
    %v864 = vunpack.c.l.b16 %v227
    %v865 = vunpack.c.h.b16 %v227
    %v866 = vunpack.c.l.b16 %v228
    %v867 = vunpack.c.h.b16 %v228
    %v868 = vunpack.c.l.b16 %v229
    %v869 = vunpack.c.h.b16 %v229
    %v870 = vunpack.c.l.b16 %v230
    %v871 = vunpack.c.h.b16 %v230
    %v872 = vunpack.c.l.b16 %v231
    %v873 = vunpack.c.h.b16 %v231
    %v874 = vunpack.c.l.b16 %v232
    %v875 = vunpack.c.h.b16 %v232
    %v876 = vunpack.c.l.b16 %v233
    %v877 = vunpack.c.h.b16 %v233
    %v878 = vunpack.c.l.b16 %v234
    %v879 = vunpack.c.h.b16 %v234
    %v880 = vunpack.c.l.b16 %v235
    %v881 = vunpack.c.h.b16 %v235
    %v882 = vunpack.c.l.b16 %v236
    %v883 = vunpack.c.h.b16 %v236
    %v884 = vunpack.c.l.b16 %v237
    %v885 = vunpack.c.h.b16 %v237
    %v886 = vunpack.c.l.b16 %v238
    %v887 = vunpack.c.h.b16 %v238
    %v888 = vunpack.c.l.b16 %v239
    %v889 = vunpack.c.h.b16 %v239
    %v890 = vunpack.c.l.b16 %v240
    %v891 = vunpack.c.h.b16 %v240
    %v892 = vunpack.c.l.b16 %v241
    %v893 = vunpack.c.h.b16 %v241
    %v894 = vunpack.c.l.b16 %v242
    %v895 = vunpack.c.h.b16 %v242
    %v896 = vunpack.c.l.b16 %v243
    %v897 = vunpack.c.h.b16 %v243
    %v898 = vunpack.c.l.b16 %v244
    %v899 = vunpack.c.h.b16 %v244
    %v900 = vunpack.c.l.b16 %v245
    %v901 = vunpack.c.h.b16 %v245
    %v902 = vunpack.c.l.b16 %v246
    %v903 = vunpack.c.h.b16 %v246
    %v904 = vunpack.c.l.b16 %v247
    %v905 = vunpack.c.h.b16 %v247
    %v906 = vunpack.c.l.b16 %v248
    %v907 = vunpack.c.h.b16 %v248
    %v908 = vunpack.c.l.b16 %v249
    %v909 = vunpack.c.h.b16 %v249
    %v910 = vunpack.c.l.b16 %v250
    %v911 = vunpack.c.h.b16 %v250
    %v912 = vunpack.c.l.b16 %v251
    %v913 = vunpack.c.h.b16 %v251
    %v914 = vunpack.c.l.b16 %v252
    %v915 = vunpack.c.h.b16 %v252
    %v916 = vunpack.c.l.b16 %v253
    %v917 = vunpack.c.h.b16 %v253
    %v918 = vunpack.c.l.b16 %v254
    %v919 = vunpack.c.h.b16 %v254
    %v920 = vunpack.c.l.b16 %v255
    %v921 = vunpack.c.h.b16 %v255
    %v922 = vunpack.c.l.b16 %v256
    %v923 = vunpack.c.h.b16 %v256
    %v924 = vunpack.c.l.b16 %v257
    %v925 = vunpack.c.h.b16 %v257
    %v926 = vunpack.c.l.b16 %v258
    %v927 = vunpack.c.h.b16 %v258
    %v928 = vunpack.c.l.b16 %v259
    %v929 = vunpack.c.h.b16 %v259
    %v930 = vunpack.c.l.b16 %v260
    %v931 = vunpack.c.h.b16 %v260
    %v932 = vunpack.c.l.b16 %v261
    %v933 = vunpack.c.h.b16 %v261
    %v934 = vunpack.c.l.b16 %v262
    %v935 = vunpack.c.h.b16 %v262
    %v936 = vunpack.c.l.b16 %v263
    %v937 = vunpack.c.h.b16 %v263
    %v938 = vunpack.c.l.b16 %v264
    %v939 = vunpack.c.h.b16 %v264
    %v940 = vunpack.c.l.b16 %v265
    %v941 = vunpack.c.h.b16 %v265
    %v942 = vunpack.c.l.b16 %v266
    %v943 = vunpack.c.h.b16 %v266
    %v944 = vunpack.c.l.b16 %v267
    %v945 = vunpack.c.h.b16 %v267
    %v946 = vunpack.c.l.b16 %v268
    %v947 = vunpack.c.h.b16 %v268
    %v948 = vunpack.c.l.b16 %v269
    %v949 = vunpack.c.h.b16 %v269
    %v950 = vunpack.c.l.b16 %v270
    %v951 = vunpack.c.h.b16 %v270
    %v952 = vunpack.c.l.b16 %v271
    %v953 = vunpack.c.h.b16 %v271
    %v954 = vunpack.c.l.b16 %v272
    %v955 = vunpack.c.h.b16 %v272
    %v956 = vunpack.c.l.b16 %v273
    %v957 = vunpack.c.h.b16 %v273
    %v958 = vunpack.c.l.b16 %v274
    %v959 = vunpack.c.h.b16 %v274
    %v960 = vunpack.c.l.b16 %v275
    %v961 = vunpack.c.h.b16 %v275
    %v962 = vunpack.c.l.b16 %v276
    %v963 = vunpack.c.h.b16 %v276
    %v964 = vunpack.c.l.b16 %v277
    %v965 = vunpack.c.h.b16 %v277
    %v966 = vunpack.c.l.b16 %v278
    %v967 = vunpack.c.h.b16 %v278
    %v968 = vunpack.c.l.b16 %v279
    %v969 = vunpack.c.h.b16 %v279
    %v970 = vunpack.c.l.b16 %v280
    %v971 = vunpack.c.h.b16 %v280
    %v972 = vunpack.c.l.b16 %v281
    %v973 = vunpack.c.h.b16 %v281
    %v974 = vunpack.c.l.b16 %v282
    %v975 = vunpack.c.h.b16 %v282
    %v976 = vunpack.c.l.b16 %v283
    %v977 = vunpack.c.h.b16 %v283
    %v978 = vunpack.c.l.b16 %v284
    %v979 = vunpack.c.h.b16 %v284
    %v980 = vunpack.c.l.b16 %v285
    %v981 = vunpack.c.h.b16 %v285
    %v982 = vunpack.c.l.b16 %v286
    %v983 = vunpack.c.h.b16 %v286
    %v984 = vunpack.c.l.b16 %v287
    %v985 = vunpack.c.h.b16 %v287
    %v986 = vunpack.c.l.b16 %v288
    %v987 = vunpack.c.h.b16 %v288
    %v988 = vunpack.c.l.b16 %v289
    %v989 = vunpack.c.h.b16 %v289
    %v990 = vunpack.c.l.b16 %v290
    %v991 = vunpack.c.h.b16 %v290
    %v992 = vunpack.c.l.b16 %v291
    %v993 = vunpack.c.h.b16 %v291
    %v994 = vunpack.c.l.b16 %v292
    %v995 = vunpack.c.h.b16 %v292
    %v996 = vunpack.c.l.b16 %v293
    %v997 = vunpack.c.h.b16 %v293
    %v998 = vunpack.c.l.b16 %v294
    %v999 = vunpack.c.h.b16 %v294
    %v1000 = vunpack.c.l.b16 %v295
    %v1001 = vunpack.c.h.b16 %v295
    %v1002 = vunpack.c.l.b16 %v296
    %v1003 = vunpack.c.h.b16 %v296
    %v1004 = vunpack.c.l.b16 %v297
    %v1005 = vunpack.c.h.b16 %v297
    %v1006 = vunpack.c.l.b16 %v298
    %v1007 = vunpack.c.h.b16 %v298
    %v1008 = vunpack.c.l.b16 %v299
    %v1009 = vunpack.c.h.b16 %v299
    %v1010 = vunpack.c.l.b16 %v300
    %v1011 = vunpack.c.h.b16 %v300
    %v1012 = vunpack.c.l.b16 %v301
    %v1013 = vunpack.c.h.b16 %v301
    %v1014 = vunpack.c.l.b16 %v302
    %v1015 = vunpack.c.h.b16 %v302
    %v1016 = vunpack.c.l.b16 %v303
    %v1017 = vunpack.c.h.b16 %v303
    %v1018 = vunpack.c.l.b16 %v304
    %v1019 = vunpack.c.h.b16 %v304
    %v1020 = vunpack.c.l.b16 %v305
    %v1021 = vunpack.c.h.b16 %v305
    %v1022 = vunpack.c.l.b16 %v306
    %v1023 = vunpack.c.h.b16 %v306
    %v1024 = vunpack.c.l.b16 %v307
    %v1025 = vunpack.c.h.b16 %v307
    %v1026 = vunpack.c.l.b16 %v308
    %v1027 = vunpack.c.h.b16 %v308
    %v1028 = vunpack.c.l.b16 %v309
    %v1029 = vunpack.c.h.b16 %v309
    %v1030 = vunpack.c.l.b16 %v310
    %v1031 = vunpack.c.h.b16 %v310
    %v1032 = vunpack.c.l.b16 %v311
    %v1033 = vunpack.c.h.b16 %v311
    %v1034 = vunpack.c.l.b16 %v312
    %v1035 = vunpack.c.h.b16 %v312
    %v1036 = vunpack.c.l.b16 %v313
    %v1037 = vunpack.c.h.b16 %v313
    %v1038 = vunpack.c.l.b16 %v314
    %v1039 = vunpack.c.h.b16 %v314
    %v1040 = vunpack.c.l.b16 %v315
    %v1041 = vunpack.c.h.b16 %v315
    %v1042 = vunpack.c.l.b16 %v316
    %v1043 = vunpack.c.h.b16 %v316
    %v1044 = vunpack.c.l.b16 %v317
    %v1045 = vunpack.c.h.b16 %v317
    %v1046 = vunpack.c.l.b16 %v318
    %v1047 = vunpack.c.h.b16 %v318
    %v1048 = vunpack.c.l.b16 %v319
    %v1049 = vunpack.c.h.b16 %v319
    %v1050 = vunpack.c.l.b16 %v320
    %v1051 = vunpack.c.h.b16 %v320
    %v1052 = vunpack.c.l.b16 %v321
    %v1053 = vunpack.c.h.b16 %v321
    %v1054 = vunpack.c.l.b16 %v322
    %v1055 = vunpack.c.h.b16 %v322
    %v1056 = vunpack.c.l.b16 %v323
    %v1057 = vunpack.c.h.b16 %v323
    %v1058 = vunpack.c.l.b16 %v324
    %v1059 = vunpack.c.h.b16 %v324
    %v1060 = vunpack.c.l.b16 %v325
    %v1061 = vunpack.c.h.b16 %v325
    %v1062 = vunpack.c.l.b16 %v326
    %v1063 = vunpack.c.h.b16 %v326
    %v1064 = vunpack.c.l.b16 %v327
    %v1065 = vunpack.c.h.b16 %v327
    %v1066 = vunpack.c.l.b16 %v328
    %v1067 = vunpack.c.h.b16 %v328
    %v1068 = vunpack.c.l.b16 %v329
    %v1069 = vunpack.c.h.b16 %v329
    %v1070 = vunpack.c.l.b16 %v330
    %v1071 = vunpack.c.h.b16 %v330
    %v1072 = vunpack.c.l.b16 %v331
    %v1073 = vunpack.c.h.b16 %v331
    %v1074 = vunpack.c.l.b16 %v332
    %v1075 = vunpack.c.h.b16 %v332
    %v1076 = vunpack.c.l.b16 %v333
    %v1077 = vunpack.c.h.b16 %v333
    %v1078 = vunpack.c.l.b16 %v334
    %v1079 = vunpack.c.h.b16 %v334
    %v1080 = vunpack.c.l.b16 %v335
    %v1081 = vunpack.c.h.b16 %v335
    %v1082 = vunpack.c.l.b16 %v336
    %v1083 = vunpack.c.h.b16 %v336
    %v1084 = vunpack.c.l.b16 %v337
    %v1085 = vunpack.c.h.b16 %v337
    %v1086 = vunpack.c.l.b16 %v338
    %v1087 = vunpack.c.h.b16 %v338
    %v1088 = vunpack.c.l.b16 %v339
    %v1089 = vunpack.c.h.b16 %v339
    %v1090 = vunpack.c.l.b16 %v340
    %v1091 = vunpack.c.h.b16 %v340
    %v1092 = vunpack.c.l.b16 %v341
    %v1093 = vunpack.c.h.b16 %v341
    %v1094 = vunpack.c.l.b16 %v342
    %v1095 = vunpack.c.h.b16 %v342
    %v1096 = vunpack.c.l.b16 %v343
    %v1097 = vunpack.c.h.b16 %v343
    %v1098 = vunpack.c.l.b16 %v344
    %v1099 = vunpack.c.h.b16 %v344
    %v1100 = vunpack.c.l.b16 %v345
    %v1101 = vunpack.c.h.b16 %v345
    %v1102 = vunpack.c.l.b16 %v346
    %v1103 = vunpack.c.h.b16 %v346
    %v1104 = vunpack.c.l.b16 %v347
    %v1105 = vunpack.c.h.b16 %v347
    %v1106 = vunpack.c.l.b16 %v348
    %v1107 = vunpack.c.h.b16 %v348
    %v1108 = vunpack.c.l.b16 %v349
    %v1109 = vunpack.c.h.b16 %v349
    %v1110 = vunpack.c.l.b16 %v350
    %v1111 = vunpack.c.h.b16 %v350
    %v1112 = vunpack.c.l.b16 %v351
    %v1113 = vunpack.c.h.b16 %v351
    %v1114 = vunpack.c.l.b16 %v352
    %v1115 = vunpack.c.h.b16 %v352
    %v1116 = vunpack.c.l.b16 %v353
    %v1117 = vunpack.c.h.b16 %v353
    %v1118 = vunpack.c.l.b16 %v354
    %v1119 = vunpack.c.h.b16 %v354
    %v1120 = vunpack.c.l.b16 %v355
    %v1121 = vunpack.c.h.b16 %v355
    %v1122 = vunpack.c.l.b16 %v356
    %v1123 = vunpack.c.h.b16 %v356
    %v1124 = vunpack.c.l.b16 %v357
    %v1125 = vunpack.c.h.b16 %v357
    %v1126 = vunpack.c.l.b16 %v358
    %v1127 = vunpack.c.h.b16 %v358
    %v1128 = vunpack.c.l.b16 %v359
    %v1129 = vunpack.c.h.b16 %v359
    %v1130 = vunpack.c.l.b16 %v360
    %v1131 = vunpack.c.h.b16 %v360
    %v1132 = vunpack.c.l.b16 %v361
    %v1133 = vunpack.c.h.b16 %v361
    %v1134 = vunpack.c.l.b16 %v362
    %v1135 = vunpack.c.h.b16 %v362
    %v1136 = vunpack.c.l.b16 %v363
    %v1137 = vunpack.c.h.b16 %v363
    %v1138 = vunpack.c.l.b16 %v364
    %v1139 = vunpack.c.h.b16 %v364
    %v1140 = vunpack.c.l.b16 %v365
    %v1141 = vunpack.c.h.b16 %v365
    %v1142 = vunpack.c.l.b16 %v366
    %v1143 = vunpack.c.h.b16 %v366
    %v1144 = vunpack.c.l.b16 %v367
    %v1145 = vunpack.c.h.b16 %v367
    %v1146 = vunpack.c.l.b16 %v368
    %v1147 = vunpack.c.h.b16 %v368
    %v1148 = vunpack.c.l.b16 %v369
    %v1149 = vunpack.c.h.b16 %v369
    %v1150 = vunpack.c.l.b16 %v370
    %v1151 = vunpack.c.h.b16 %v370
    %v1152 = vunpack.c.l.b16 %v371
    %v1153 = vunpack.c.h.b16 %v371
    %v1154 = vunpack.c.l.b16 %v372
    %v1155 = vunpack.c.h.b16 %v372
    %v1156 = vunpack.c.l.b16 %v373
    %v1157 = vunpack.c.h.b16 %v373
    %v1158 = vunpack.c.l.b16 %v374
    %v1159 = vunpack.c.h.b16 %v374
    %v1160 = vunpack.c.l.b16 %v375
    %v1161 = vunpack.c.h.b16 %v375
    %v1162 = vunpack.c.l.b16 %v376
    %v1163 = vunpack.c.h.b16 %v376
    %v1164 = vunpack.c.l.b16 %v377
    %v1165 = vunpack.c.h.b16 %v377
    %v1166 = vunpack.c.l.b16 %v378
    %v1167 = vunpack.c.h.b16 %v378
    %v1168 = vunpack.c.l.b16 %v379
    %v1169 = vunpack.c.h.b16 %v379
    %v1170 = vpack.c.b16 %v662, %v658
    %v1171 = vpack.c.b16 %v663, %v659
    %v1172 = vpack.c.b16 %v664, %v660
    %v1173 = vpack.c.b16 %v665, %v661
    %v1174 = vpack.c.b16 %v670, %v666
    %v1175 = vpack.c.b16 %v671, %v667
    %v1176 = vpack.c.b16 %v672, %v668
    %v1177 = vpack.c.b16 %v673, %v669
    %v1178 = vpack.c.b16 %v678, %v674
    %v1179 = vpack.c.b16 %v679, %v675
    %v1180 = vpack.c.b16 %v680, %v676
    %v1181 = vpack.c.b16 %v681, %v677
    %v1182 = vpack.c.b16 %v686, %v682
    %v1183 = vpack.c.b16 %v687, %v683
    %v1184 = vpack.c.b16 %v688, %v684
    %v1185 = vpack.c.b16 %v689, %v685
    %v1186 = vpack.c.b16 %v694, %v690
    %v1187 = vpack.c.b16 %v695, %v691
    %v1188 = vpack.c.b16 %v696, %v692
    %v1189 = vpack.c.b16 %v697, %v693
    %v1190 = vpack.c.b16 %v702, %v698
    %v1191 = vpack.c.b16 %v703, %v699
    %v1192 = vpack.c.b16 %v704, %v700
    %v1193 = vpack.c.b16 %v705, %v701
    %v1194 = vpack.c.b16 %v710, %v706
    %v1195 = vpack.c.b16 %v711, %v707
    %v1196 = vpack.c.b16 %v712, %v708
    %v1197 = vpack.c.b16 %v713, %v709
    %v1198 = vpack.c.b16 %v718, %v714
    %v1199 = vpack.c.b16 %v719, %v715
    %v1200 = vpack.c.b16 %v720, %v716
    %v1201 = vpack.c.b16 %v721, %v717
    %v1202 = vpack.c.b16 %v726, %v722
    %v1203 = vpack.c.b16 %v727, %v723
    %v1204 = vpack.c.b16 %v728, %v724
    %v1205 = vpack.c.b16 %v729, %v725
    %v1206 = vpack.c.b16 %v734, %v730
    %v1207 = vpack.c.b16 %v735, %v731
    %v1208 = vpack.c.b16 %v736, %v732
    %v1209 = vpack.c.b16 %v737, %v733
    %v1210 = vpack.c.b16 %v742, %v738
    %v1211 = vpack.c.b16 %v743, %v739
    %v1212 = vpack.c.b16 %v744, %v740
    %v1213 = vpack.c.b16 %v745, %v741
    %v1214 = vpack.c.b16 %v750, %v746
    %v1215 = vpack.c.b16 %v751, %v747
    %v1216 = vpack.c.b16 %v752, %v748
    %v1217 = vpack.c.b16 %v753, %v749
    %v1218 = vpack.c.b16 %v758, %v754
    %v1219 = vpack.c.b16 %v759, %v755
    %v1220 = vpack.c.b16 %v760, %v756
    %v1221 = vpack.c.b16 %v761, %v757
    %v1222 = vpack.c.b16 %v766, %v762
    %v1223 = vpack.c.b16 %v767, %v763
    %v1224 = vpack.c.b16 %v768, %v764
    %v1225 = vpack.c.b16 %v769, %v765
    %v1226 = vpack.c.b16 %v774, %v770
    %v1227 = vpack.c.b16 %v775, %v771
    %v1228 = vpack.c.b16 %v776, %v772
    %v1229 = vpack.c.b16 %v777, %v773
    %v1230 = vpack.c.b16 %v782, %v778
    %v1231 = vpack.c.b16 %v783, %v779
    %v1232 = vpack.c.b16 %v784, %v780
    %v1233 = vpack.c.b16 %v785, %v781
    %v1234 = vpack.c.b16 %v790, %v786
    %v1235 = vpack.c.b16 %v791, %v787
    %v1236 = vpack.c.b16 %v792, %v788
    %v1237 = vpack.c.b16 %v793, %v789
    %v1238 = vpack.c.b16 %v798, %v794
    %v1239 = vpack.c.b16 %v799, %v795
    %v1240 = vpack.c.b16 %v800, %v796
    %v1241 = vpack.c.b16 %v801, %v797
    %v1242 = vpack.c.b16 %v806, %v802
    %v1243 = vpack.c.b16 %v807, %v803
    %v1244 = vpack.c.b16 %v808, %v804
    %v1245 = vpack.c.b16 %v809, %v805
    %v1246 = vpack.c.b16 %v814, %v810
    %v1247 = vpack.c.b16 %v815, %v811
    %v1248 = vpack.c.b16 %v816, %v812
    %v1249 = vpack.c.b16 %v817, %v813
    %v1250 = vpack.c.b16 %v822, %v818
    %v1251 = vpack.c.b16 %v823, %v819
    %v1252 = vpack.c.b16 %v824, %v820
    %v1253 = vpack.c.b16 %v825, %v821
    %v1254 = vpack.c.b16 %v830, %v826
    %v1255 = vpack.c.b16 %v831, %v827
    %v1256 = vpack.c.b16 %v832, %v828
    %v1257 = vpack.c.b16 %v833, %v829
    %v1258 = vpack.c.b16 %v838, %v834
    %v1259 = vpack.c.b16 %v839, %v835
    %v1260 = vpack.c.b16 %v840, %v836
    %v1261 = vpack.c.b16 %v841, %v837
    %v1262 = vpack.c.b16 %v846, %v842
    %v1263 = vpack.c.b16 %v847, %v843
    %v1264 = vpack.c.b16 %v848, %v844
    %v1265 = vpack.c.b16 %v849, %v845
    %v1266 = vpack.c.b16 %v854, %v850
    %v1267 = vpack.c.b16 %v855, %v851
    %v1268 = vpack.c.b16 %v856, %v852
    %v1269 = vpack.c.b16 %v857, %v853
    %v1270 = vpack.c.b16 %v862, %v858
    %v1271 = vpack.c.b16 %v863, %v859
    %v1272 = vpack.c.b16 %v864, %v860
    %v1273 = vpack.c.b16 %v865, %v861
    %v1274 = vpack.c.b16 %v870, %v866
    %v1275 = vpack.c.b16 %v871, %v867
    %v1276 = vpack.c.b16 %v872, %v868
    %v1277 = vpack.c.b16 %v873, %v869
    %v1278 = vpack.c.b16 %v878, %v874
    %v1279 = vpack.c.b16 %v879, %v875
    %v1280 = vpack.c.b16 %v880, %v876
    %v1281 = vpack.c.b16 %v881, %v877
    %v1282 = vpack.c.b16 %v886, %v882
    %v1283 = vpack.c.b16 %v887, %v883
    %v1284 = vpack.c.b16 %v888, %v884
    %v1285 = vpack.c.b16 %v889, %v885
    %v1286 = vpack.c.b16 %v894, %v890
    %v1287 = vpack.c.b16 %v895, %v891
    %v1288 = vpack.c.b16 %v896, %v892
    %v1289 = vpack.c.b16 %v897, %v893
    %v1290 = vpack.c.b16 %v902, %v898
    %v1291 = vpack.c.b16 %v903, %v899
    %v1292 = vpack.c.b16 %v904, %v900
    %v1293 = vpack.c.b16 %v905, %v901
    %v1294 = vpack.c.b16 %v910, %v906
    %v1295 = vpack.c.b16 %v911, %v907
    %v1296 = vpack.c.b16 %v912, %v908
    %v1297 = vpack.c.b16 %v913, %v909
    %v1298 = vpack.c.b16 %v918, %v914
    %v1299 = vpack.c.b16 %v919, %v915
    %v1300 = vpack.c.b16 %v920, %v916
    %v1301 = vpack.c.b16 %v921, %v917
    %v1302 = vpack.c.b16 %v926, %v922
    %v1303 = vpack.c.b16 %v927, %v923
    %v1304 = vpack.c.b16 %v928, %v924
    %v1305 = vpack.c.b16 %v929, %v925
    %v1306 = vpack.c.b16 %v934, %v930
    %v1307 = vpack.c.b16 %v935, %v931
    %v1308 = vpack.c.b16 %v936, %v932
    %v1309 = vpack.c.b16 %v937, %v933
    %v1310 = vpack.c.b16 %v942, %v938
    %v1311 = vpack.c.b16 %v943, %v939
    %v1312 = vpack.c.b16 %v944, %v940
    %v1313 = vpack.c.b16 %v945, %v941
    %v1314 = vpack.c.b16 %v950, %v946
    %v1315 = vpack.c.b16 %v951, %v947
    %v1316 = vpack.c.b16 %v952, %v948
    %v1317 = vpack.c.b16 %v953, %v949
    %v1318 = vpack.c.b16 %v958, %v954
    %v1319 = vpack.c.b16 %v959, %v955
    %v1320 = vpack.c.b16 %v960, %v956
    %v1321 = vpack.c.b16 %v961, %v957
    %v1322 = vpack.c.b16 %v966, %v962
    %v1323 = vpack.c.b16 %v967, %v963
    %v1324 = vpack.c.b16 %v968, %v964
    %v1325 = vpack.c.b16 %v969, %v965
    %v1326 = vpack.c.b16 %v974, %v970
    %v1327 = vpack.c.b16 %v975, %v971
    %v1328 = vpack.c.b16 %v976, %v972
    %v1329 = vpack.c.b16 %v977, %v973
    %v1330 = vpack.c.b16 %v982, %v978
    %v1331 = vpack.c.b16 %v983, %v979
    %v1332 = vpack.c.b16 %v984, %v980
    %v1333 = vpack.c.b16 %v985, %v981
    %v1334 = vpack.c.b16 %v990, %v986
    %v1335 = vpack.c.b16 %v991, %v987
    %v1336 = vpack.c.b16 %v992, %v988
    %v1337 = vpack.c.b16 %v993, %v989
    %v1338 = vpack.c.b16 %v998, %v994
    %v1339 = vpack.c.b16 %v999, %v995
    %v1340 = vpack.c.b16 %v1000, %v996
    %v1341 = vpack.c.b16 %v1001, %v997
    %v1342 = vpack.c.b16 %v1006, %v1002
    %v1343 = vpack.c.b16 %v1007, %v1003
    %v1344 = vpack.c.b16 %v1008, %v1004
    %v1345 = vpack.c.b16 %v1009, %v1005
    %v1346 = vpack.c.b16 %v1014, %v1010
    %v1347 = vpack.c.b16 %v1015, %v1011
    %v1348 = vpack.c.b16 %v1016, %v1012
    %v1349 = vpack.c.b16 %v1017, %v1013
    %v1350 = vpack.c.b16 %v1022, %v1018
    %v1351 = vpack.c.b16 %v1023, %v1019
    %v1352 = vpack.c.b16 %v1024, %v1020
    %v1353 = vpack.c.b16 %v1025, %v1021
    %v1354 = vpack.c.b16 %v1030, %v1026
    %v1355 = vpack.c.b16 %v1031, %v1027
    %v1356 = vpack.c.b16 %v1032, %v1028
    %v1357 = vpack.c.b16 %v1033, %v1029
    %v1358 = vpack.c.b16 %v1038, %v1034
    %v1359 = vpack.c.b16 %v1039, %v1035
    %v1360 = vpack.c.b16 %v1040, %v1036
    %v1361 = vpack.c.b16 %v1041, %v1037
    %v1362 = vpack.c.b16 %v1046, %v1042
    %v1363 = vpack.c.b16 %v1047, %v1043
    %v1364 = vpack.c.b16 %v1048, %v1044
    %v1365 = vpack.c.b16 %v1049, %v1045
    %v1366 = vpack.c.b16 %v1054, %v1050
    %v1367 = vpack.c.b16 %v1055, %v1051
    %v1368 = vpack.c.b16 %v1056, %v1052
    %v1369 = vpack.c.b16 %v1057, %v1053
    %v1370 = vpack.c.b16 %v1062, %v1058
    %v1371 = vpack.c.b16 %v1063, %v1059
    %v1372 = vpack.c.b16 %v1064, %v1060
    %v1373 = vpack.c.b16 %v1065, %v1061
    %v1374 = vpack.c.b16 %v1070, %v1066
    %v1375 = vpack.c.b16 %v1071, %v1067
    %v1376 = vpack.c.b16 %v1072, %v1068
    %v1377 = vpack.c.b16 %v1073, %v1069
    %v1378 = vpack.c.b16 %v1078, %v1074
    %v1379 = vpack.c.b16 %v1079, %v1075
    %v1380 = vpack.c.b16 %v1080, %v1076
    %v1381 = vpack.c.b16 %v1081, %v1077
    %v1382 = vpack.c.b16 %v1086, %v1082
    %v1383 = vpack.c.b16 %v1087, %v1083
    %v1384 = vpack.c.b16 %v1088, %v1084
    %v1385 = vpack.c.b16 %v1089, %v1085
    %v1386 = vpack.c.b16 %v1094, %v1090
    %v1387 = vpack.c.b16 %v1095, %v1091
    %v1388 = vpack.c.b16 %v1096, %v1092
    %v1389 = vpack.c.b16 %v1097, %v1093
    %v1390 = vpack.c.b16 %v1102, %v1098
    %v1391 = vpack.c.b16 %v1103, %v1099
    %v1392 = vpack.c.b16 %v1104, %v1100
    %v1393 = vpack.c.b16 %v1105, %v1101
    %v1394 = vpack.c.b16 %v1110, %v1106
    %v1395 = vpack.c.b16 %v1111, %v1107
    %v1396 = vpack.c.b16 %v1112, %v1108
    %v1397 = vpack.c.b16 %v1113, %v1109
    %v1398 = vpack.c.b16 %v1118, %v1114
    %v1399 = vpack.c.b16 %v1119, %v1115
    %v1400 = vpack.c.b16 %v1120, %v1116
    %v1401 = vpack.c.b16 %v1121, %v1117
    %v1402 = vpack.c.b16 %v1126, %v1122
    %v1403 = vpack.c.b16 %v1127, %v1123
    %v1404 = vpack.c.b16 %v1128, %v1124
    %v1405 = vpack.c.b16 %v1129, %v1125
    %v1406 = vpack.c.b16 %v1134, %v1130
    %v1407 = vpack.c.b16 %v1135, %v1131
    %v1408 = vpack.c.b16 %v1136, %v1132
    %v1409 = vpack.c.b16 %v1137, %v1133
    %v1410 = vpack.c.b16 %v1142, %v1138
    %v1411 = vpack.c.b16 %v1143, %v1139
    %v1412 = vpack.c.b16 %v1144, %v1140
    %v1413 = vpack.c.b16 %v1145, %v1141
    %v1414 = vpack.c.b16 %v1150, %v1146
    %v1415 = vpack.c.b16 %v1151, %v1147
    %v1416 = vpack.c.b16 %v1152, %v1148
    %v1417 = vpack.c.b16 %v1153, %v1149
    %v1418 = vpack.c.b16 %v1158, %v1154
    %v1419 = vpack.c.b16 %v1159, %v1155
    %v1420 = vpack.c.b16 %v1160, %v1156
    %v1421 = vpack.c.b16 %v1161, %v1157
    %v1422 = vpack.c.b16 %v1166, %v1162
    %v1423 = vpack.c.b16 %v1167, %v1163
    %v1424 = vpack.c.b16 %v1168, %v1164
    %v1425 = vpack.c.b16 %v1169, %v1165
    %1682 = vmatprep.subr.bf16.mxu0 %v1171
    %1683 = vmatpush1.bf16.msra.mxu0 %v1170
    %1684 = vmatprep.subr.bf16.mxu0 %v1175
    %1685 = vmatpush1.bf16.msra.mxu0 %v1174
    %1686 = vmatprep.subr.bf16.mxu0 %v1179
    %1687 = vmatpush1.bf16.msra.mxu0 %v1178
    %1688 = vmatprep.subr.bf16.mxu0 %v1183
    %1689 = vmatpush1.bf16.msra.mxu0 %v1182
    %1690 = vmatprep.subr.bf16.mxu0 %v1187
    %1691 = vmatpush1.bf16.msra.mxu0 %v1186
    %1692 = vmatprep.subr.bf16.mxu0 %v1191
    %1693 = vmatpush1.bf16.msra.mxu0 %v1190
    %1694 = vmatprep.subr.bf16.mxu0 %v1195
    %1695 = vmatpush1.bf16.msra.mxu0 %v1194
    %1696 = vmatprep.subr.bf16.mxu0 %v1199
    %1697 = vmatpush1.bf16.msra.mxu0 %v1198
    %1698 = vmatprep.subr.bf16.mxu0 %v1203
    %1699 = vmatpush1.bf16.msra.mxu0 %v1202
    %1700 = vmatprep.subr.bf16.mxu0 %v1207
    %1701 = vmatpush1.bf16.msra.mxu0 %v1206
    %1702 = vmatprep.subr.bf16.mxu0 %v1211
    %1703 = vmatpush1.bf16.msra.mxu0 %v1210
    %1704 = vmatprep.subr.bf16.mxu0 %v1215
    %1705 = vmatpush1.bf16.msra.mxu0 %v1214
    %1706 = vmatprep.subr.bf16.mxu0 %v1219
    %1707 = vmatpush1.bf16.msra.mxu0 %v1218
    %1708 = vmatprep.subr.bf16.mxu0 %v1223
    %1709 = vmatpush1.bf16.msra.mxu0 %v1222
    %1710 = vmatprep.subr.bf16.mxu0 %v1227
    %1711 = vmatpush1.bf16.msra.mxu0 %v1226
    %1712 = vmatprep.subr.bf16.mxu0 %v1231
    %1713 = vmatpush1.bf16.msra.mxu0 %v1230
    %1714 = vmatprep.mubr.bf16.mxu0 %v117
    %1715 = vmatmul.mubr.bf16.gmra.mrb[0].mxu0 %v116
    %v1716 = vpop.f32.mrb[0].mxu0
    %v1717 = vadd.f32 %v385, %v1716
    %v1718 = vpop.f32.mrb[0].mxu0
    %v1719 = vadd.f32 %v389, %v1718
    %v1720 = vpop.f32.mrb[0].mxu0
    %v1721 = vadd.f32 %v385, %v1720
    %v1722 = vpop.f32.mrb[0].mxu0
    %v1723 = vadd.f32 %v389, %v1722
    %1724 = vdwg.mxu0
    %1725 = vmatprep.subr.bf16.mxu0 %v1235
    %1726 = vmatpush1.bf16.msra.mxu0 %v1234
    %1727 = vmatprep.subr.bf16.mxu0 %v1239
    %1728 = vmatpush1.bf16.msra.mxu0 %v1238
    %1729 = vmatprep.subr.bf16.mxu0 %v1243
    %1730 = vmatpush1.bf16.msra.mxu0 %v1242
    %1731 = vmatprep.subr.bf16.mxu0 %v1247
    %1732 = vmatpush1.bf16.msra.mxu0 %v1246
    %1733 = vmatprep.subr.bf16.mxu0 %v1251
    %1734 = vmatpush1.bf16.msra.mxu0 %v1250
    %1735 = vmatprep.subr.bf16.mxu0 %v1255
    %1736 = vmatpush1.bf16.msra.mxu0 %v1254
    %1737 = vmatprep.subr.bf16.mxu0 %v1259
    %1738 = vmatpush1.bf16.msra.mxu0 %v1258
    %1739 = vmatprep.subr.bf16.mxu0 %v1263
    %1740 = vmatpush1.bf16.msra.mxu0 %v1262
    %1741 = vmatprep.subr.bf16.mxu0 %v1267
    %1742 = vmatpush1.bf16.msra.mxu0 %v1266
    %1743 = vmatprep.subr.bf16.mxu0 %v1271
    %1744 = vmatpush1.bf16.msra.mxu0 %v1270
    %1745 = vmatprep.subr.bf16.mxu0 %v1275
    %1746 = vmatpush1.bf16.msra.mxu0 %v1274
    %1747 = vmatprep.subr.bf16.mxu0 %v1279
    %1748 = vmatpush1.bf16.msra.mxu0 %v1278
    %1749 = vmatprep.subr.bf16.mxu0 %v1283
    %1750 = vmatpush1.bf16.msra.mxu0 %v1282
    %1751 = vmatprep.subr.bf16.mxu0 %v1287
    %1752 = vmatpush1.bf16.msra.mxu0 %v1286
    %1753 = vmatprep.subr.bf16.mxu0 %v1291
    %1754 = vmatpush1.bf16.msra.mxu0 %v1290
    %1755 = vmatprep.subr.bf16.mxu0 %v1295
    %1756 = vmatpush1.bf16.msra.mxu0 %v1294
    %1757 = vmatprep.mubr.bf16.mxu0 %v119
    %1758 = vmatmul.mubr.bf16.gmra.mrb[0].mxu0 %v118
    %v1759 = vpop.f32.mrb[0].mxu0
    %v1760 = vadd.f32 %v1717, %v1759
    %v1761 = vpop.f32.mrb[0].mxu0
    %v1762 = vadd.f32 %v1719, %v1761
    %v1763 = vpop.f32.mrb[0].mxu0
    %v1764 = vadd.f32 %v1721, %v1763
    %v1765 = vpop.f32.mrb[0].mxu0
    %v1766 = vadd.f32 %v1723, %v1765
    %1767 = vdwg.mxu0
    %1768 = vmatprep.subr.bf16.mxu0 %v1299
    %1769 = vmatpush1.bf16.msra.mxu0 %v1298
    %1770 = vmatprep.subr.bf16.mxu0 %v1303
    %1771 = vmatpush1.bf16.msra.mxu0 %v1302
    %1772 = vmatprep.subr.bf16.mxu0 %v1307
    %1773 = vmatpush1.bf16.msra.mxu0 %v1306
    %1774 = vmatprep.subr.bf16.mxu0 %v1311
    %1775 = vmatpush1.bf16.msra.mxu0 %v1310
    %1776 = vmatprep.subr.bf16.mxu0 %v1315
    %1777 = vmatpush1.bf16.msra.mxu0 %v1314
    %1778 = vmatprep.subr.bf16.mxu0 %v1319
    %1779 = vmatpush1.bf16.msra.mxu0 %v1318
    %1780 = vmatprep.subr.bf16.mxu0 %v1323
    %1781 = vmatpush1.bf16.msra.mxu0 %v1322
    %1782 = vmatprep.subr.bf16.mxu0 %v1327
    %1783 = vmatpush1.bf16.msra.mxu0 %v1326
    %1784 = vmatprep.subr.bf16.mxu0 %v1331
    %1785 = vmatpush1.bf16.msra.mxu0 %v1330
    %1786 = vmatprep.subr.bf16.mxu0 %v1335
    %1787 = vmatpush1.bf16.msra.mxu0 %v1334
    %1788 = vmatprep.subr.bf16.mxu0 %v1339
    %1789 = vmatpush1.bf16.msra.mxu0 %v1338
    %1790 = vmatprep.subr.bf16.mxu0 %v1343
    %1791 = vmatpush1.bf16.msra.mxu0 %v1342
    %1792 = vmatprep.subr.bf16.mxu0 %v1347
    %1793 = vmatpush1.bf16.msra.mxu0 %v1346
    %1794 = vmatprep.subr.bf16.mxu0 %v1351
    %1795 = vmatpush1.bf16.msra.mxu0 %v1350
    %1796 = vmatprep.subr.bf16.mxu0 %v1355
    %1797 = vmatpush1.bf16.msra.mxu0 %v1354
    %1798 = vmatprep.subr.bf16.mxu0 %v1359
    %1799 = vmatpush1.bf16.msra.mxu0 %v1358
    %1800 = vmatprep.mubr.bf16.mxu0 %v121
    %1801 = vmatmul.mubr.bf16.gmra.mrb[0].mxu0 %v120
    %v1802 = vpop.f32.mrb[0].mxu0
    %v1803 = vadd.f32 %v1760, %v1802
    %v1804 = vpop.f32.mrb[0].mxu0
    %v1805 = vadd.f32 %v1762, %v1804
    %v1806 = vpop.f32.mrb[0].mxu0
    %v1807 = vadd.f32 %v1764, %v1806
    %v1808 = vpop.f32.mrb[0].mxu0
    %v1809 = vadd.f32 %v1766, %v1808
    %1810 = vdwg.mxu0
    %1811 = vmatprep.subr.bf16.mxu0 %v1363
    %1812 = vmatpush1.bf16.msra.mxu0 %v1362
    %1813 = vmatprep.subr.bf16.mxu0 %v1367
    %1814 = vmatpush1.bf16.msra.mxu0 %v1366
    %1815 = vmatprep.subr.bf16.mxu0 %v1371
    %1816 = vmatpush1.bf16.msra.mxu0 %v1370
    %1817 = vmatprep.subr.bf16.mxu0 %v1375
    %1818 = vmatpush1.bf16.msra.mxu0 %v1374
    %1819 = vmatprep.subr.bf16.mxu0 %v1379
    %1820 = vmatpush1.bf16.msra.mxu0 %v1378
    %1821 = vmatprep.subr.bf16.mxu0 %v1383
    %1822 = vmatpush1.bf16.msra.mxu0 %v1382
    %1823 = vmatprep.subr.bf16.mxu0 %v1387
    %1824 = vmatpush1.bf16.msra.mxu0 %v1386
    %1825 = vmatprep.subr.bf16.mxu0 %v1391
    %1826 = vmatpush1.bf16.msra.mxu0 %v1390
    %1827 = vmatprep.subr.bf16.mxu0 %v1395
    %1828 = vmatpush1.bf16.msra.mxu0 %v1394
    %1829 = vmatprep.subr.bf16.mxu0 %v1399
    %1830 = vmatpush1.bf16.msra.mxu0 %v1398
    %1831 = vmatprep.subr.bf16.mxu0 %v1403
    %1832 = vmatpush1.bf16.msra.mxu0 %v1402
    %1833 = vmatprep.subr.bf16.mxu0 %v1407
    %1834 = vmatpush1.bf16.msra.mxu0 %v1406
    %1835 = vmatprep.subr.bf16.mxu0 %v1411
    %1836 = vmatpush1.bf16.msra.mxu0 %v1410
    %1837 = vmatprep.subr.bf16.mxu0 %v1415
    %1838 = vmatpush1.bf16.msra.mxu0 %v1414
    %1839 = vmatprep.subr.bf16.mxu0 %v1419
    %1840 = vmatpush1.bf16.msra.mxu0 %v1418
    %1841 = vmatprep.subr.bf16.mxu0 %v1423
    %1842 = vmatpush1.bf16.msra.mxu0 %v1422
    %1843 = vmatprep.mubr.bf16.mxu0 %v123
    %1844 = vmatmul.mubr.bf16.gmra.mrb[0].mxu0 %v122
    %v1845 = vpop.f32.mrb[0].mxu0
    %v1846 = vadd.f32 %v1803, %v1845
    %v1847 = vpop.f32.mrb[0].mxu0
    %v1848 = vadd.f32 %v1805, %v1847
    %v1849 = vpop.f32.mrb[0].mxu0
    %v1850 = vadd.f32 %v1807, %v1849
    %v1851 = vpop.f32.mrb[0].mxu0
    %v1852 = vadd.f32 %v1809, %v1851
    %1853 = vdwg.mxu0
    %1854 = vmatprep.subr.bf16.mxu0 %v1173
    %1855 = vmatpush1.bf16.msra.mxu0 %v1172
    %1856 = vmatprep.subr.bf16.mxu0 %v1177
    %1857 = vmatpush1.bf16.msra.mxu0 %v1176
    %1858 = vmatprep.subr.bf16.mxu0 %v1181
    %1859 = vmatpush1.bf16.msra.mxu0 %v1180
    %1860 = vmatprep.subr.bf16.mxu0 %v1185
    %1861 = vmatpush1.bf16.msra.mxu0 %v1184
    %1862 = vmatprep.subr.bf16.mxu0 %v1189
    %1863 = vmatpush1.bf16.msra.mxu0 %v1188
    %1864 = vmatprep.subr.bf16.mxu0 %v1193
    %1865 = vmatpush1.bf16.msra.mxu0 %v1192
    %1866 = vmatprep.subr.bf16.mxu0 %v1197
    %1867 = vmatpush1.bf16.msra.mxu0 %v1196
    %1868 = vmatprep.subr.bf16.mxu0 %v1201
    %1869 = vmatpush1.bf16.msra.mxu0 %v1200
    %1870 = vmatprep.subr.bf16.mxu0 %v1205
    %1871 = vmatpush1.bf16.msra.mxu0 %v1204
    %1872 = vmatprep.subr.bf16.mxu0 %v1209
    %1873 = vmatpush1.bf16.msra.mxu0 %v1208
    %1874 = vmatprep.subr.bf16.mxu0 %v1213
    %1875 = vmatpush1.bf16.msra.mxu0 %v1212
    %1876 = vmatprep.subr.bf16.mxu0 %v1217
    %1877 = vmatpush1.bf16.msra.mxu0 %v1216
    %1878 = vmatprep.subr.bf16.mxu0 %v1221
    %1879 = vmatpush1.bf16.msra.mxu0 %v1220
    %1880 = vmatprep.subr.bf16.mxu0 %v1225
    %1881 = vmatpush1.bf16.msra.mxu0 %v1224
    %1882 = vmatprep.subr.bf16.mxu0 %v1229
    %1883 = vmatpush1.bf16.msra.mxu0 %v1228
    %1884 = vmatprep.subr.bf16.mxu0 %v1233
    %1885 = vmatpush1.bf16.msra.mxu0 %v1232
    %1886 = vmatprep.mubr.bf16.mxu0 %v117
    %1887 = vmatmul.mubr.bf16.gmra.mrb[0].mxu0 %v116
    %v1888 = vpop.f32.mrb[0].mxu0
    %v1889 = vadd.f32 %v393, %v1888
    %v1890 = vpop.f32.mrb[0].mxu0
    %v1891 = vadd.f32 %v397, %v1890
    %v1892 = vpop.f32.mrb[0].mxu0
    %v1893 = vadd.f32 %v393, %v1892
    %v1894 = vpop.f32.mrb[0].mxu0
    %v1895 = vadd.f32 %v397, %v1894
    %1896 = vdwg.mxu0
    %1897 = vmatprep.subr.bf16.mxu0 %v1237
    %1898 = vmatpush1.bf16.msra.mxu0 %v1236
    %1899 = vmatprep.subr.bf16.mxu0 %v1241
    %1900 = vmatpush1.bf16.msra.mxu0 %v1240
    %1901 = vmatprep.subr.bf16.mxu0 %v1245
    %1902 = vmatpush1.bf16.msra.mxu0 %v1244
    %1903 = vmatprep.subr.bf16.mxu0 %v1249
    %1904 = vmatpush1.bf16.msra.mxu0 %v1248
    %1905 = vmatprep.subr.bf16.mxu0 %v1253
    %1906 = vmatpush1.bf16.msra.mxu0 %v1252
    %1907 = vmatprep.subr.bf16.mxu0 %v1257
    %1908 = vmatpush1.bf16.msra.mxu0 %v1256
    %1909 = vmatprep.subr.bf16.mxu0 %v1261
    %1910 = vmatpush1.bf16.msra.mxu0 %v1260
    %1911 = vmatprep.subr.bf16.mxu0 %v1265
    %1912 = vmatpush1.bf16.msra.mxu0 %v1264
    %1913 = vmatprep.subr.bf16.mxu0 %v1269
    %1914 = vmatpush1.bf16.msra.mxu0 %v1268
    %1915 = vmatprep.subr.bf16.mxu0 %v1273
    %1916 = vmatpush1.bf16.msra.mxu0 %v1272
    %1917 = vmatprep.subr.bf16.mxu0 %v1277
    %1918 = vmatpush1.bf16.msra.mxu0 %v1276
    %1919 = vmatprep.subr.bf16.mxu0 %v1281
    %1920 = vmatpush1.bf16.msra.mxu0 %v1280
    %1921 = vmatprep.subr.bf16.mxu0 %v1285
    %1922 = vmatpush1.bf16.msra.mxu0 %v1284
    %1923 = vmatprep.subr.bf16.mxu0 %v1289
    %1924 = vmatpush1.bf16.msra.mxu0 %v1288
    %1925 = vmatprep.subr.bf16.mxu0 %v1293
    %1926 = vmatpush1.bf16.msra.mxu0 %v1292
    %1927 = vmatprep.subr.bf16.mxu0 %v1297
    %1928 = vmatpush1.bf16.msra.mxu0 %v1296
    %1929 = vmatprep.mubr.bf16.mxu0 %v119
    %1930 = vmatmul.mubr.bf16.gmra.mrb[0].mxu0 %v118
    %v1931 = vpop.f32.mrb[0].mxu0
    %v1932 = vadd.f32 %v1889, %v1931
    %v1933 = vpop.f32.mrb[0].mxu0
    %v1934 = vadd.f32 %v1891, %v1933
    %v1935 = vpop.f32.mrb[0].mxu0
    %v1936 = vadd.f32 %v1893, %v1935
    %v1937 = vpop.f32.mrb[0].mxu0
    %v1938 = vadd.f32 %v1895, %v1937
    %1939 = vdwg.mxu0
    %1940 = vmatprep.subr.bf16.mxu0 %v1301
    %1941 = vmatpush1.bf16.msra.mxu0 %v1300
    %1942 = vmatprep.subr.bf16.mxu0 %v1305
    %1943 = vmatpush1.bf16.msra.mxu0 %v1304
    %1944 = vmatprep.subr.bf16.mxu0 %v1309
    %1945 = vmatpush1.bf16.msra.mxu0 %v1308
    %1946 = vmatprep.subr.bf16.mxu0 %v1313
    %1947 = vmatpush1.bf16.msra.mxu0 %v1312
    %1948 = vmatprep.subr.bf16.mxu0 %v1317
    %1949 = vmatpush1.bf16.msra.mxu0 %v1316
    %1950 = vmatprep.subr.bf16.mxu0 %v1321
    %1951 = vmatpush1.bf16.msra.mxu0 %v1320
    %1952 = vmatprep.subr.bf16.mxu0 %v1325
    %1953 = vmatpush1.bf16.msra.mxu0 %v1324
    %1954 = vmatprep.subr.bf16.mxu0 %v1329
    %1955 = vmatpush1.bf16.msra.mxu0 %v1328
    %1956 = vmatprep.subr.bf16.mxu0 %v1333
    %1957 = vmatpush1.bf16.msra.mxu0 %v1332
    %1958 = vmatprep.subr.bf16.mxu0 %v1337
    %1959 = vmatpush1.bf16.msra.mxu0 %v1336
    %1960 = vmatprep.subr.bf16.mxu0 %v1341
    %1961 = vmatpush1.bf16.msra.mxu0 %v1340
    %1962 = vmatprep.subr.bf16.mxu0 %v1345
    %1963 = vmatpush1.bf16.msra.mxu0 %v1344
    %1964 = vmatprep.subr.bf16.mxu0 %v1349
    %1965 = vmatpush1.bf16.msra.mxu0 %v1348
    %1966 = vmatprep.subr.bf16.mxu0 %v1353
    %1967 = vmatpush1.bf16.msra.mxu0 %v1352
    %1968 = vmatprep.subr.bf16.mxu0 %v1357
    %1969 = vmatpush1.bf16.msra.mxu0 %v1356
    %1970 = vmatprep.subr.bf16.mxu0 %v1361
    %1971 = vmatpush1.bf16.msra.mxu0 %v1360
    %1972 = vmatprep.mubr.bf16.mxu0 %v121
    %1973 = vmatmul.mubr.bf16.gmra.mrb[0].mxu0 %v120
    %v1974 = vpop.f32.mrb[0].mxu0
    %v1975 = vadd.f32 %v1932, %v1974
    %v1976 = vpop.f32.mrb[0].mxu0
    %v1977 = vadd.f32 %v1934, %v1976
    %v1978 = vpop.f32.mrb[0].mxu0
    %v1979 = vadd.f32 %v1936, %v1978
    %v1980 = vpop.f32.mrb[0].mxu0
    %v1981 = vadd.f32 %v1938, %v1980
    %1982 = vdwg.mxu0
    %1983 = vmatprep.subr.bf16.mxu0 %v1365
    %1984 = vmatpush1.bf16.msra.mxu0 %v1364
    %1985 = vmatprep.subr.bf16.mxu0 %v1369
    %1986 = vmatpush1.bf16.msra.mxu0 %v1368
    %1987 = vmatprep.subr.bf16.mxu0 %v1373
    %1988 = vmatpush1.bf16.msra.mxu0 %v1372
    %1989 = vmatprep.subr.bf16.mxu0 %v1377
    %1990 = vmatpush1.bf16.msra.mxu0 %v1376
    %1991 = vmatprep.subr.bf16.mxu0 %v1381
    %1992 = vmatpush1.bf16.msra.mxu0 %v1380
    %1993 = vmatprep.subr.bf16.mxu0 %v1385
    %1994 = vmatpush1.bf16.msra.mxu0 %v1384
    %1995 = vmatprep.subr.bf16.mxu0 %v1389
    %1996 = vmatpush1.bf16.msra.mxu0 %v1388
    %1997 = vmatprep.subr.bf16.mxu0 %v1393
    %1998 = vmatpush1.bf16.msra.mxu0 %v1392
    %1999 = vmatprep.subr.bf16.mxu0 %v1397
    %2000 = vmatpush1.bf16.msra.mxu0 %v1396
    %2001 = vmatprep.subr.bf16.mxu0 %v1401
    %2002 = vmatpush1.bf16.msra.mxu0 %v1400
    %2003 = vmatprep.subr.bf16.mxu0 %v1405
    %2004 = vmatpush1.bf16.msra.mxu0 %v1404
    %2005 = vmatprep.subr.bf16.mxu0 %v1409
    %2006 = vmatpush1.bf16.msra.mxu0 %v1408
    %2007 = vmatprep.subr.bf16.mxu0 %v1413
    %2008 = vmatpush1.bf16.msra.mxu0 %v1412
    %2009 = vmatprep.subr.bf16.mxu0 %v1417
    %2010 = vmatpush1.bf16.msra.mxu0 %v1416
    %2011 = vmatprep.subr.bf16.mxu0 %v1421
    %2012 = vmatpush1.bf16.msra.mxu0 %v1420
    %2013 = vmatprep.subr.bf16.mxu0 %v1425
    %2014 = vmatpush1.bf16.msra.mxu0 %v1424
    %2015 = vmatprep.mubr.bf16.mxu0 %v123
    %2016 = vmatmul.mubr.bf16.gmra.mrb[0].mxu0 %v122
    %v2017 = vpop.f32.mrb[0].mxu0
    %v2018 = vadd.f32 %v1975, %v2017
    %v2019 = vpop.f32.mrb[0].mxu0
    %v2020 = vadd.f32 %v1977, %v2019
    %v2021 = vpop.f32.mrb[0].mxu0
    %v2022 = vadd.f32 %v1979, %v2021
    %v2023 = vpop.f32.mrb[0].mxu0
    %v2024 = vadd.f32 %v1981, %v2023
    %2025 = vdwg.mxu0
    %v2026 = vmax.f32 %v1846, 0.0
    %v2027 = vmax.f32 %v1848, 0.0
    %v2028 = vmax.f32 %v2018, 0.0
    %v2029 = vmax.f32 %v2020, 0.0
    %v2030 = vmax.f32 %v1850, 0.0
    %v2031 = vmax.f32 %v1852, 0.0
    %v2032 = vmax.f32 %v2022, 0.0
    %v2033 = vmax.f32 %v2024, 0.0
    %v2034 = vpack.c.bf16 %v2030, %v2026
    %v2035 = vpack.c.bf16 %v2031, %v2027
    %v2036 = vpack.c.bf16 %v2032, %v2028
    %v2037 = vpack.c.bf16 %v2033, %v2029
    %v2038 = vld [vmem:[%s3] sm:$0xf]
    %v2039 = vld [vmem:[%s3 + $0x4] sm:$0xf]
    %v2040 = vld [vmem:[%s3 + $0x8] sm:$0xf]
    %v2041 = vld [vmem:[%s3 + $0xc] sm:$0xf]
    %v2042 = vld [vmem:[%s3 + $0x10] sm:$0xf]
    %v2043 = vld [vmem:[%s3 + $0x14] sm:$0xf]
    %v2044 = vld [vmem:[%s3 + $0x18] sm:$0xf]
    %v2045 = vld [vmem:[%s3 + $0x1c] sm:$0xf]
    %v2046 = vld [vmem:[%s3 + $0x20] sm:$0xf]
    %v2047 = vld [vmem:[%s3 + $0x24] sm:$0xf]
    %v2048 = vld [vmem:[%s3 + $0x28] sm:$0xf]
    %v2049 = vld [vmem:[%s3 + $0x2c] sm:$0xf]
    %v2050 = vld [vmem:[%s3 + $0x30] sm:$0xf]
    %v2051 = vld [vmem:[%s3 + $0x34] sm:$0xf]
    %v2052 = vld [vmem:[%s3 + $0x38] sm:$0xf]
    %v2053 = vld [vmem:[%s3 + $0x3c] sm:$0xf]
    %v2054 = vld [vmem:[%s3 + $0x40] sm:$0xf]
    %v2055 = vld [vmem:[%s3 + $0x44] sm:$0xf]
    %v2056 = vld [vmem:[%s3 + $0x48] sm:$0xf]
    %v2057 = vld [vmem:[%s3 + $0x4c] sm:$0xf]
    %v2058 = vld [vmem:[%s3 + $0x50] sm:$0xf]
    %v2059 = vld [vmem:[%s3 + $0x54] sm:$0xf]
    %v2060 = vld [vmem:[%s3 + $0x58] sm:$0xf]
    %v2061 = vld [vmem:[%s3 + $0x5c] sm:$0xf]
    %v2062 = vld [vmem:[%s3 + $0x60] sm:$0xf]
    %v2063 = vld [vmem:[%s3 + $0x64] sm:$0xf]
    %v2064 = vld [vmem:[%s3 + $0x68] sm:$0xf]
    %v2065 = vld [vmem:[%s3 + $0x6c] sm:$0xf]
    %v2066 = vld [vmem:[%s3 + $0x70] sm:$0xf]
    %v2067 = vld [vmem:[%s3 + $0x74] sm:$0xf]
    %v2068 = vld [vmem:[%s3 + $0x78] sm:$0xf]
    %v2069 = vld [vmem:[%s3 + $0x7c] sm:$0xf]
    %v2070 = vld [vmem:[%s3 + $0x80] sm:$0xf]
    %v2071 = vld [vmem:[%s3 + $0x84] sm:$0xf]
    %v2072 = vld [vmem:[%s3 + $0x88] sm:$0xf]
    %v2073 = vld [vmem:[%s3 + $0x8c] sm:$0xf]
    %v2074 = vld [vmem:[%s3 + $0x90] sm:$0xf]
    %v2075 = vld [vmem:[%s3 + $0x94] sm:$0xf]
    %v2076 = vld [vmem:[%s3 + $0x98] sm:$0xf]
    %v2077 = vld [vmem:[%s3 + $0x9c] sm:$0xf]
    %v2078 = vld [vmem:[%s3 + $0xa0] sm:$0xf]
    %v2079 = vld [vmem:[%s3 + $0xa4] sm:$0xf]
    %v2080 = vld [vmem:[%s3 + $0xa8] sm:$0xf]
    %v2081 = vld [vmem:[%s3 + $0xac] sm:$0xf]
    %v2082 = vld [vmem:[%s3 + $0xb0] sm:$0xf]
    %v2083 = vld [vmem:[%s3 + $0xb4] sm:$0xf]
    %v2084 = vld [vmem:[%s3 + $0xb8] sm:$0xf]
    %v2085 = vld [vmem:[%s3 + $0xbc] sm:$0xf]
    %v2086 = vld [vmem:[%s3 + $0xc0] sm:$0xf]
    %v2087 = vld [vmem:[%s3 + $0xc4] sm:$0xf]
    %v2088 = vld [vmem:[%s3 + $0xc8] sm:$0xf]
    %v2089 = vld [vmem:[%s3 + $0xcc] sm:$0xf]
    %v2090 = vld [vmem:[%s3 + $0xd0] sm:$0xf]
    %v2091 = vld [vmem:[%s3 + $0xd4] sm:$0xf]
    %v2092 = vld [vmem:[%s3 + $0xd8] sm:$0xf]
    %v2093 = vld [vmem:[%s3 + $0xdc] sm:$0xf]
    %v2094 = vld [vmem:[%s3 + $0xe0] sm:$0xf]
    %v2095 = vld [vmem:[%s3 + $0xe4] sm:$0xf]
    %v2096 = vld [vmem:[%s3 + $0xe8] sm:$0xf]
    %v2097 = vld [vmem:[%s3 + $0xec] sm:$0xf]
    %v2098 = vld [vmem:[%s3 + $0xf0] sm:$0xf]
    %v2099 = vld [vmem:[%s3 + $0xf4] sm:$0xf]
    %v2100 = vld [vmem:[%s3 + $0xf8] sm:$0xf]
    %v2101 = vld [vmem:[%s3 + $0xfc] sm:$0xf]
    %v2102 = vld [vmem:[%s4] sm:$0x1]
    %v2104 = vlaneseq
    %v2105 = vshrl.u32 %v2104, 7
    %v2106 = vsub.s32 0, %v2105
    %v2107 = vrot.slane %v2102, %v2106
    %v2173 = vunpack.c.l.b16 %v2038
    %v2174 = vunpack.c.l.b16 %v2039
    %v2175 = vunpack.c.l.b16 %v2040
    %v2176 = vunpack.c.l.b16 %v2041
    %v2177 = vunpack.c.l.b16 %v2042
    %v2178 = vunpack.c.l.b16 %v2043
    %v2179 = vunpack.c.l.b16 %v2044
    %v2180 = vunpack.c.l.b16 %v2045
    %v2181 = vunpack.c.l.b16 %v2046
    %v2182 = vunpack.c.l.b16 %v2047
    %v2183 = vunpack.c.l.b16 %v2048
    %v2184 = vunpack.c.l.b16 %v2049
    %v2185 = vunpack.c.l.b16 %v2050
    %v2186 = vunpack.c.l.b16 %v2051
    %v2187 = vunpack.c.l.b16 %v2052
    %v2188 = vunpack.c.l.b16 %v2053
    %v2189 = vunpack.c.l.b16 %v2054
    %v2190 = vunpack.c.l.b16 %v2055
    %v2191 = vunpack.c.l.b16 %v2056
    %v2192 = vunpack.c.l.b16 %v2057
    %v2193 = vunpack.c.l.b16 %v2058
    %v2194 = vunpack.c.l.b16 %v2059
    %v2195 = vunpack.c.l.b16 %v2060
    %v2196 = vunpack.c.l.b16 %v2061
    %v2197 = vunpack.c.l.b16 %v2062
    %v2198 = vunpack.c.l.b16 %v2063
    %v2199 = vunpack.c.l.b16 %v2064
    %v2200 = vunpack.c.l.b16 %v2065
    %v2201 = vunpack.c.l.b16 %v2066
    %v2202 = vunpack.c.l.b16 %v2067
    %v2203 = vunpack.c.l.b16 %v2068
    %v2204 = vunpack.c.l.b16 %v2069
    %v2205 = vunpack.c.l.b16 %v2070
    %v2206 = vunpack.c.l.b16 %v2071
    %v2207 = vunpack.c.l.b16 %v2072
    %v2208 = vunpack.c.l.b16 %v2073
    %v2209 = vunpack.c.l.b16 %v2074
    %v2210 = vunpack.c.l.b16 %v2075
    %v2211 = vunpack.c.l.b16 %v2076
    %v2212 = vunpack.c.l.b16 %v2077
    %v2213 = vunpack.c.l.b16 %v2078
    %v2214 = vunpack.c.l.b16 %v2079
    %v2215 = vunpack.c.l.b16 %v2080
    %v2216 = vunpack.c.l.b16 %v2081
    %v2217 = vunpack.c.l.b16 %v2082
    %v2218 = vunpack.c.l.b16 %v2083
    %v2219 = vunpack.c.l.b16 %v2084
    %v2220 = vunpack.c.l.b16 %v2085
    %v2221 = vunpack.c.l.b16 %v2086
    %v2222 = vunpack.c.l.b16 %v2087
    %v2223 = vunpack.c.l.b16 %v2088
    %v2224 = vunpack.c.l.b16 %v2089
    %v2225 = vunpack.c.l.b16 %v2090
    %v2226 = vunpack.c.l.b16 %v2091
    %v2227 = vunpack.c.l.b16 %v2092
    %v2228 = vunpack.c.l.b16 %v2093
    %v2229 = vunpack.c.l.b16 %v2094
    %v2230 = vunpack.c.l.b16 %v2095
    %v2231 = vunpack.c.l.b16 %v2096
    %v2232 = vunpack.c.l.b16 %v2097
    %v2233 = vunpack.c.l.b16 %v2098
    %v2234 = vunpack.c.l.b16 %v2099
    %v2235 = vunpack.c.l.b16 %v2100
    %v2236 = vunpack.c.l.b16 %v2101
    %v2237 = vpack.c.b16 %v2174, %v2173
    %v2238 = vpack.c.b16 %v2176, %v2175
    %v2239 = vpack.c.b16 %v2178, %v2177
    %v2240 = vpack.c.b16 %v2180, %v2179
    %v2241 = vpack.c.b16 %v2182, %v2181
    %v2242 = vpack.c.b16 %v2184, %v2183
    %v2243 = vpack.c.b16 %v2186, %v2185
    %v2244 = vpack.c.b16 %v2188, %v2187
    %v2245 = vpack.c.b16 %v2190, %v2189
    %v2246 = vpack.c.b16 %v2192, %v2191
    %v2247 = vpack.c.b16 %v2194, %v2193
    %v2248 = vpack.c.b16 %v2196, %v2195
    %v2249 = vpack.c.b16 %v2198, %v2197
    %v2250 = vpack.c.b16 %v2200, %v2199
    %v2251 = vpack.c.b16 %v2202, %v2201
    %v2252 = vpack.c.b16 %v2204, %v2203
    %v2253 = vpack.c.b16 %v2206, %v2205
    %v2254 = vpack.c.b16 %v2208, %v2207
    %v2255 = vpack.c.b16 %v2210, %v2209
    %v2256 = vpack.c.b16 %v2212, %v2211
    %v2257 = vpack.c.b16 %v2214, %v2213
    %v2258 = vpack.c.b16 %v2216, %v2215
    %v2259 = vpack.c.b16 %v2218, %v2217
    %v2260 = vpack.c.b16 %v2220, %v2219
    %v2261 = vpack.c.b16 %v2222, %v2221
    %v2262 = vpack.c.b16 %v2224, %v2223
    %v2263 = vpack.c.b16 %v2226, %v2225
    %v2264 = vpack.c.b16 %v2228, %v2227
    %v2265 = vpack.c.b16 %v2230, %v2229
    %v2266 = vpack.c.b16 %v2232, %v2231
    %v2267 = vpack.c.b16 %v2234, %v2233
    %v2268 = vpack.c.b16 %v2236, %v2235
    %2301 = vmatprep.subr.bf16.mxu0 0
    %2302 = vmatpush1.bf16.msra.mxu0 %v2237
    %2303 = vmatprep.subr.bf16.mxu0 0
    %2304 = vmatpush1.bf16.msra.mxu0 %v2238
    %2305 = vmatprep.subr.bf16.mxu0 0
    %2306 = vmatpush1.bf16.msra.mxu0 %v2239
    %2307 = vmatprep.subr.bf16.mxu0 0
    %2308 = vmatpush1.bf16.msra.mxu0 %v2240
    %2309 = vmatprep.subr.bf16.mxu0 0
    %2310 = vmatpush1.bf16.msra.mxu0 %v2241
    %2311 = vmatprep.subr.bf16.mxu0 0
    %2312 = vmatpush1.bf16.msra.mxu0 %v2242
    %2313 = vmatprep.subr.bf16.mxu0 0
    %2314 = vmatpush1.bf16.msra.mxu0 %v2243
    %2315 = vmatprep.subr.bf16.mxu0 0
    %2316 = vmatpush1.bf16.msra.mxu0 %v2244
    %2317 = vmatprep.subr.bf16.mxu0 0
    %2318 = vmatpush1.bf16.msra.mxu0 %v2245
    %2319 = vmatprep.subr.bf16.mxu0 0
    %2320 = vmatpush1.bf16.msra.mxu0 %v2246
    %2321 = vmatprep.subr.bf16.mxu0 0
    %2322 = vmatpush1.bf16.msra.mxu0 %v2247
    %2323 = vmatprep.subr.bf16.mxu0 0
    %2324 = vmatpush1.bf16.msra.mxu0 %v2248
    %2325 = vmatprep.subr.bf16.mxu0 0
    %2326 = vmatpush1.bf16.msra.mxu0 %v2249
    %2327 = vmatprep.subr.bf16.mxu0 0
    %2328 = vmatpush1.bf16.msra.mxu0 %v2250
    %2329 = vmatprep.subr.bf16.mxu0 0
    %2330 = vmatpush1.bf16.msra.mxu0 %v2251
    %2331 = vmatprep.subr.bf16.mxu0 0
    %2332 = vmatpush1.bf16.msra.mxu0 %v2252
    %2333 = vmatprep.mubr.bf16.mxu0 %v2035
    %2334 = vmatmul.mubr.bf16.gmra.mrb[0].mxu0 %v2034
    %v2335 = vpop.f32.mrb[0].mxu0
    %v2336 = vadd.f32 %v2107, %v2335
    %v2337 = vpop.f32.mrb[0].mxu0
    %v2338 = vpop.f32.mrb[0].mxu0
    %v2339 = vadd.f32 %v2107, %v2338
    %v2340 = vpop.f32.mrb[0].mxu0
    %2341 = vdwg.mxu0
    %2342 = vmatprep.subr.bf16.mxu0 0
    %2343 = vmatpush1.bf16.msra.mxu0 %v2253
    %2344 = vmatprep.subr.bf16.mxu0 0
    %2345 = vmatpush1.bf16.msra.mxu0 %v2254
    %2346 = vmatprep.subr.bf16.mxu0 0
    %2347 = vmatpush1.bf16.msra.mxu0 %v2255
    %2348 = vmatprep.subr.bf16.mxu0 0
    %2349 = vmatpush1.bf16.msra.mxu0 %v2256
    %2350 = vmatprep.subr.bf16.mxu0 0
    %2351 = vmatpush1.bf16.msra.mxu0 %v2257
    %2352 = vmatprep.subr.bf16.mxu0 0
    %2353 = vmatpush1.bf16.msra.mxu0 %v2258
    %2354 = vmatprep.subr.bf16.mxu0 0
    %2355 = vmatpush1.bf16.msra.mxu0 %v2259
    %2356 = vmatprep.subr.bf16.mxu0 0
    %2357 = vmatpush1.bf16.msra.mxu0 %v2260
    %2358 = vmatprep.subr.bf16.mxu0 0
    %2359 = vmatpush1.bf16.msra.mxu0 %v2261
    %2360 = vmatprep.subr.bf16.mxu0 0
    %2361 = vmatpush1.bf16.msra.mxu0 %v2262
    %2362 = vmatprep.subr.bf16.mxu0 0
    %2363 = vmatpush1.bf16.msra.mxu0 %v2263
    %2364 = vmatprep.subr.bf16.mxu0 0
    %2365 = vmatpush1.bf16.msra.mxu0 %v2264
    %2366 = vmatprep.subr.bf16.mxu0 0
    %2367 = vmatpush1.bf16.msra.mxu0 %v2265
    %2368 = vmatprep.subr.bf16.mxu0 0
    %2369 = vmatpush1.bf16.msra.mxu0 %v2266
    %2370 = vmatprep.subr.bf16.mxu0 0
    %2371 = vmatpush1.bf16.msra.mxu0 %v2267
    %2372 = vmatprep.subr.bf16.mxu0 0
    %2373 = vmatpush1.bf16.msra.mxu0 %v2268
    %2374 = vmatprep.mubr.bf16.mxu0 %v2037
    %2375 = vmatmul.mubr.bf16.gmra.mrb[0].mxu0 %v2036
    %v2376 = vpop.f32.mrb[0].mxu0
    %v2377 = vadd.f32 %v2336, %v2376
    %v2378 = vpop.f32.mrb[0].mxu0
    %v2379 = vpop.f32.mrb[0].mxu0
    %v2380 = vadd.f32 %v2339, %v2379
    %v2381 = vpop.f32.mrb[0].mxu0
    %2382 = vdwg.mxu0
    %v2383 = vmax.f32 %v2377, 0.0
    %v2384 = vmax.f32 %v2380, 0.0
    %v2385 = vpack.c.bf16 %v2384, %v2383
    %v2386 = vld [vmem:[%s5] sm:$0xf]
    %v2387 = vld [vmem:[%s5 + $0x4] sm:$0xf]
    %v2388 = vld [vmem:[%s5 + $0x8] sm:$0xf]
    %v2389 = vld [vmem:[%s5 + $0xc] sm:$0xf]
    %v2390 = vld [vmem:[%s5 + $0x10] sm:$0xf]
    %v2391 = vld [vmem:[%s5 + $0x14] sm:$0xf]
    %v2392 = vld [vmem:[%s5 + $0x18] sm:$0xf]
    %v2393 = vld [vmem:[%s5 + $0x1c] sm:$0xf]
    %v2394 = vld [vmem:[%s5 + $0x20] sm:$0xf]
    %v2395 = vld [vmem:[%s5 + $0x24] sm:$0xf]
    %v2396 = vld [vmem:[%s5 + $0x28] sm:$0xf]
    %v2397 = vld [vmem:[%s5 + $0x2c] sm:$0xf]
    %v2398 = vld [vmem:[%s5 + $0x30] sm:$0xf]
    %v2399 = vld [vmem:[%s5 + $0x34] sm:$0xf]
    %v2400 = vld [vmem:[%s5 + $0x38] sm:$0xf]
    %v2401 = vld [vmem:[%s5 + $0x3c] sm:$0xf]
    %v2402 = vld [vmem:[%s6] sm:$0x1]
    %v2404 = vlaneseq
    %v2405 = vshrl.u32 %v2404, 7
    %v2406 = vsub.s32 0, %v2405
    %v2407 = vrot.slane %v2402, %v2406
    %v2425 = vunpack.c.l.b16 %v2386
    %v2426 = vunpack.c.l.b16 %v2387
    %v2427 = vunpack.c.l.b16 %v2388
    %v2428 = vunpack.c.l.b16 %v2389
    %v2429 = vunpack.c.l.b16 %v2390
    %v2430 = vunpack.c.l.b16 %v2391
    %v2431 = vunpack.c.l.b16 %v2392
    %v2432 = vunpack.c.l.b16 %v2393
    %v2433 = vunpack.c.l.b16 %v2394
    %v2434 = vunpack.c.l.b16 %v2395
    %v2435 = vunpack.c.l.b16 %v2396
    %v2436 = vunpack.c.l.b16 %v2397
    %v2437 = vunpack.c.l.b16 %v2398
    %v2438 = vunpack.c.l.b16 %v2399
    %v2439 = vunpack.c.l.b16 %v2400
    %v2440 = vunpack.c.l.b16 %v2401
    %v2441 = vpack.c.b16 %v2426, %v2425
    %v2442 = vpack.c.b16 %v2428, %v2427
    %v2443 = vpack.c.b16 %v2430, %v2429
    %v2444 = vpack.c.b16 %v2432, %v2431
    %v2445 = vpack.c.b16 %v2434, %v2433
    %v2446 = vpack.c.b16 %v2436, %v2435
    %v2447 = vpack.c.b16 %v2438, %v2437
    %v2448 = vpack.c.b16 %v2440, %v2439
    %2457 = vmatprep.subr.bf16.mxu0 0
    %2458 = vmatpush1.bf16.msra.mxu0 %v2441
    %2459 = vmatprep.subr.bf16.mxu0 0
    %2460 = vmatpush1.bf16.msra.mxu0 %v2442
    %2461 = vmatprep.subr.bf16.mxu0 0
    %2462 = vmatpush1.bf16.msra.mxu0 %v2443
    %2463 = vmatprep.subr.bf16.mxu0 0
    %2464 = vmatpush1.bf16.msra.mxu0 %v2444
    %2465 = vmatprep.subr.bf16.mxu0 0
    %2466 = vmatpush1.bf16.msra.mxu0 %v2445
    %2467 = vmatprep.subr.bf16.mxu0 0
    %2468 = vmatpush1.bf16.msra.mxu0 %v2446
    %2469 = vmatprep.subr.bf16.mxu0 0
    %2470 = vmatpush1.bf16.msra.mxu0 %v2447
    %2471 = vmatprep.subr.bf16.mxu0 0
    %2472 = vmatpush1.bf16.msra.mxu0 %v2448
    %2473 = vmatprep.subr.bf16.mxu0 0
    %2474 = vmatpush1.bf16.msra.mxu0 0
    %2475 = vmatprep.subr.bf16.mxu0 0
    %2476 = vmatpush1.bf16.msra.mxu0 0
    %2477 = vmatprep.subr.bf16.mxu0 0
    %2478 = vmatpush1.bf16.msra.mxu0 0
    %2479 = vmatprep.subr.bf16.mxu0 0
    %2480 = vmatpush1.bf16.msra.mxu0 0
    %2481 = vmatprep.subr.bf16.mxu0 0
    %2482 = vmatpush1.bf16.msra.mxu0 0
    %2483 = vmatprep.subr.bf16.mxu0 0
    %2484 = vmatpush1.bf16.msra.mxu0 0
    %2485 = vmatprep.subr.bf16.mxu0 0
    %2486 = vmatpush1.bf16.msra.mxu0 0
    %2487 = vmatprep.subr.bf16.mxu0 0
    %2488 = vmatpush1.bf16.msra.mxu0 0
    %2489 = vmatprep.mubr.bf16.mxu0 0
    %2490 = vmatmul.mubr.bf16.gmra.mrb[0].mxu0 %v2385
    %v2491 = vpop.f32.mrb[0].mxu0
    %v2492 = vadd.f32 %v2407, %v2491
    %v2493 = vpop.f32.mrb[0].mxu0
    %v2494 = vpop.f32.mrb[0].mxu0
    %v2495 = vadd.f32 %v2407, %v2494
    %v2496 = vpop.f32.mrb[0].mxu0
    %2497 = vdwg.mxu0
    %v2498 = vmax.f32 %v2492, 0.0
    %v2499 = vmax.f32 %v2495, 0.0
    %v2500 = vpack.c.bf16 %v2499, %v2498
    %v2501 = vld [vmem:[#allocation4] sm:$0xf]
    %v2502 = vld [vmem:[#allocation4 + $0x4] sm:$0xf]
    %v2503 = vld [vmem:[#allocation4 + $0x8] sm:$0xf]
    %v2504 = vld [vmem:[#allocation4 + $0xc] sm:$0xf]
    %v2505 = vld [vmem:[#allocation4 + $0x10] sm:$0xf]
    %v2506 = vld [vmem:[#allocation4 + $0x14] sm:$0xf]
    %v2507 = vld [vmem:[#allocation4 + $0x18] sm:$0xf]
    %v2508 = vld [vmem:[#allocation4 + $0x1c] sm:$0xf]
    %v2509 = vld [vmem:[#allocation4 + $0x20] sm:$0xf]
    %v2510 = vld [vmem:[#allocation4 + $0x24] sm:$0xf]
    %v2511 = vld [vmem:[#allocation4 + $0x28] sm:$0xf]
    %v2512 = vld [vmem:[#allocation4 + $0x2c] sm:$0xf]
    %v2513 = vld [vmem:[#allocation4 + $0x30] sm:$0xf]
    %v2514 = vld [vmem:[#allocation4 + $0x34] sm:$0xf]
    %v2515 = vld [vmem:[#allocation4 + $0x38] sm:$0xf]
    %v2516 = vld [vmem:[#allocation4 + $0x3c] sm:$0xf]
    %v2517 = vld [vmem:[%s8] sm:$0x1]
    %v2519 = vlaneseq
    %v2520 = vshrl.u32 %v2519, 7
    %v2521 = vsub.s32 0, %v2520
    %v2522 = vrot.slane %v2517, %v2521
    %v2540 = vunpack.c.l.b16 %v2501
    %v2541 = vunpack.c.l.b16 %v2502
    %v2542 = vunpack.c.l.b16 %v2503
    %v2543 = vunpack.c.l.b16 %v2504
    %v2544 = vunpack.c.l.b16 %v2505
    %v2545 = vunpack.c.l.b16 %v2506
    %v2546 = vunpack.c.l.b16 %v2507
    %v2547 = vunpack.c.l.b16 %v2508
    %v2548 = vunpack.c.l.b16 %v2509
    %v2549 = vunpack.c.l.b16 %v2510
    %v2550 = vunpack.c.l.b16 %v2511
    %v2551 = vunpack.c.l.b16 %v2512
    %v2552 = vunpack.c.l.b16 %v2513
    %v2553 = vunpack.c.l.b16 %v2514
    %v2554 = vunpack.c.l.b16 %v2515
    %v2555 = vunpack.c.l.b16 %v2516
    %v2556 = vpack.c.b16 %v2541, %v2540
    %v2557 = vpack.c.b16 %v2543, %v2542
    %v2558 = vpack.c.b16 %v2545, %v2544
    %v2559 = vpack.c.b16 %v2547, %v2546
    %v2560 = vpack.c.b16 %v2549, %v2548
    %v2561 = vpack.c.b16 %v2551, %v2550
    %v2562 = vpack.c.b16 %v2553, %v2552
    %v2563 = vpack.c.b16 %v2555, %v2554
    %2572 = vmatprep.subr.bf16.mxu0 0
    %2573 = vmatpush1.bf16.msra.mxu0 %v2556
    %2574 = vmatprep.subr.bf16.mxu0 0
    %2575 = vmatpush1.bf16.msra.mxu0 %v2557
    %2576 = vmatprep.subr.bf16.mxu0 0
    %2577 = vmatpush1.bf16.msra.mxu0 %v2558
    %2578 = vmatprep.subr.bf16.mxu0 0
    %2579 = vmatpush1.bf16.msra.mxu0 %v2559
    %2580 = vmatprep.subr.bf16.mxu0 0
    %2581 = vmatpush1.bf16.msra.mxu0 %v2560
    %2582 = vmatprep.subr.bf16.mxu0 0
    %2583 = vmatpush1.bf16.msra.mxu0 %v2561
    %2584 = vmatprep.subr.bf16.mxu0 0
    %2585 = vmatpush1.bf16.msra.mxu0 %v2562
    %2586 = vmatprep.subr.bf16.mxu0 0
    %2587 = vmatpush1.bf16.msra.mxu0 %v2563
    %2588 = vmatprep.subr.bf16.mxu0 0
    %2589 = vmatpush1.bf16.msra.mxu0 0
    %2590 = vmatprep.subr.bf16.mxu0 0
    %2591 = vmatpush1.bf16.msra.mxu0 0
    %2592 = vmatprep.subr.bf16.mxu0 0
    %2593 = vmatpush1.bf16.msra.mxu0 0
    %2594 = vmatprep.subr.bf16.mxu0 0
    %2595 = vmatpush1.bf16.msra.mxu0 0
    %2596 = vmatprep.subr.bf16.mxu0 0
    %2597 = vmatpush1.bf16.msra.mxu0 0
    %2598 = vmatprep.subr.bf16.mxu0 0
    %2599 = vmatpush1.bf16.msra.mxu0 0
    %2600 = vmatprep.subr.bf16.mxu0 0
    %2601 = vmatpush1.bf16.msra.mxu0 0
    %2602 = vmatprep.subr.bf16.mxu0 0
    %2603 = vmatpush1.bf16.msra.mxu0 0
    %2604 = vmatprep.mubr.bf16.mxu0 0
    %2605 = vmatmul.mubr.bf16.gmra.mrb[0].mxu0 %v2500
    %v2606 = vpop.f32.mrb[0].mxu0
    %v2607 = vadd.f32 %v2522, %v2606
    %v2608 = vpop.f32.mrb[0].mxu0
    %v2609 = vpop.f32.mrb[0].mxu0
    %v2610 = vadd.f32 %v2522, %v2609
    %v2611 = vpop.f32.mrb[0].mxu0
    %2612 = vdwg.mxu0
    %v2613 = vmax.f32 %v2607, 0.0
    %v2614 = vmax.f32 %v2610, 0.0
    %v2615 = vpack.c.bf16 %v2614, %v2613
    %v2616 = vld [vmem:[#allocation6] sm:$0xf]
    %v2617 = vld [vmem:[#allocation6 + $0x4] sm:$0xf]
    %v2618 = vld [vmem:[#allocation6 + $0x8] sm:$0xf]
    %v2619 = vld [vmem:[#allocation6 + $0xc] sm:$0xf]
    %v2620 = vld [vmem:[#allocation6 + $0x10] sm:$0xf]
    %v2621 = vld [vmem:[#allocation6 + $0x14] sm:$0xf]
    %v2622 = vld [vmem:[#allocation6 + $0x18] sm:$0xf]
    %v2623 = vld [vmem:[#allocation6 + $0x1c] sm:$0xf]
    %v2624 = vld [vmem:[#allocation6 + $0x20] sm:$0xf]
    %v2625 = vld [vmem:[#allocation6 + $0x24] sm:$0xf]
    %v2626 = vld [vmem:[#allocation6 + $0x28] sm:$0xf]
    %v2627 = vld [vmem:[#allocation6 + $0x2c] sm:$0xf]
    %v2628 = vld [vmem:[#allocation6 + $0x30] sm:$0xf]
    %v2629 = vld [vmem:[#allocation6 + $0x34] sm:$0xf]
    %v2630 = vld [vmem:[#allocation6 + $0x38] sm:$0xf]
    %v2631 = vld [vmem:[#allocation6 + $0x3c] sm:$0xf]
    %v2632 = vld [vmem:[%s10] sm:$0x1]
    %v2634 = vlaneseq
    %v2635 = vshrl.u32 %v2634, 7
    %v2636 = vsub.s32 0, %v2635
    %v2637 = vrot.slane %v2632, %v2636
    %v2655 = vunpack.c.l.b16 %v2616
    %v2656 = vunpack.c.l.b16 %v2617
    %v2657 = vunpack.c.l.b16 %v2618
    %v2658 = vunpack.c.l.b16 %v2619
    %v2659 = vunpack.c.l.b16 %v2620
    %v2660 = vunpack.c.l.b16 %v2621
    %v2661 = vunpack.c.l.b16 %v2622
    %v2662 = vunpack.c.l.b16 %v2623
    %v2663 = vunpack.c.l.b16 %v2624
    %v2664 = vunpack.c.l.b16 %v2625
    %v2665 = vunpack.c.l.b16 %v2626
    %v2666 = vunpack.c.l.b16 %v2627
    %v2667 = vunpack.c.l.b16 %v2628
    %v2668 = vunpack.c.l.b16 %v2629
    %v2669 = vunpack.c.l.b16 %v2630
    %v2670 = vunpack.c.l.b16 %v2631
    %v2671 = vpack.c.b16 %v2656, %v2655
    %v2672 = vpack.c.b16 %v2658, %v2657
    %v2673 = vpack.c.b16 %v2660, %v2659
    %v2674 = vpack.c.b16 %v2662, %v2661
    %v2675 = vpack.c.b16 %v2664, %v2663
    %v2676 = vpack.c.b16 %v2666, %v2665
    %v2677 = vpack.c.b16 %v2668, %v2667
    %v2678 = vpack.c.b16 %v2670, %v2669
    %2687 = vmatprep.subr.bf16.mxu0 0
    %2688 = vmatpush1.bf16.msra.mxu0 %v2671
    %2689 = vmatprep.subr.bf16.mxu0 0
    %2690 = vmatpush1.bf16.msra.mxu0 %v2672
    %2691 = vmatprep.subr.bf16.mxu0 0
    %2692 = vmatpush1.bf16.msra.mxu0 %v2673
    %2693 = vmatprep.subr.bf16.mxu0 0
    %2694 = vmatpush1.bf16.msra.mxu0 %v2674
    %2695 = vmatprep.subr.bf16.mxu0 0
    %2696 = vmatpush1.bf16.msra.mxu0 %v2675
    %2697 = vmatprep.subr.bf16.mxu0 0
    %2698 = vmatpush1.bf16.msra.mxu0 %v2676
    %2699 = vmatprep.subr.bf16.mxu0 0
    %2700 = vmatpush1.bf16.msra.mxu0 %v2677
    %2701 = vmatprep.subr.bf16.mxu0 0
    %2702 = vmatpush1.bf16.msra.mxu0 %v2678
    %2703 = vmatprep.subr.bf16.mxu0 0
    %2704 = vmatpush1.bf16.msra.mxu0 0
    %2705 = vmatprep.subr.bf16.mxu0 0
    %2706 = vmatpush1.bf16.msra.mxu0 0
    %2707 = vmatprep.subr.bf16.mxu0 0
    %2708 = vmatpush1.bf16.msra.mxu0 0
    %2709 = vmatprep.subr.bf16.mxu0 0
    %2710 = vmatpush1.bf16.msra.mxu0 0
    %2711 = vmatprep.subr.bf16.mxu0 0
    %2712 = vmatpush1.bf16.msra.mxu0 0
    %2713 = vmatprep.subr.bf16.mxu0 0
    %2714 = vmatpush1.bf16.msra.mxu0 0
    %2715 = vmatprep.subr.bf16.mxu0 0
    %2716 = vmatpush1.bf16.msra.mxu0 0
    %2717 = vmatprep.subr.bf16.mxu0 0
    %2718 = vmatpush1.bf16.msra.mxu0 0
    %2719 = vmatprep.mubr.bf16.mxu0 0
    %2720 = vmatmul.mubr.bf16.gmra.mrb[0].mxu0 %v2615
    %v2721 = vpop.f32.mrb[0].mxu0
    %v2722 = vadd.f32 %v2637, %v2721
    %v2723 = vpop.f32.mrb[0].mxu0
    %v2724 = vpop.f32.mrb[0].mxu0
    %v2725 = vadd.f32 %v2637, %v2724
    %v2726 = vpop.f32.mrb[0].mxu0
    %2727 = vdwg.mxu0
    %v2728 = vmax.f32 %v2722, 0.0
    %v2729 = vmax.f32 %v2725, 0.0
    %v2730 = vpack.c.bf16 %v2729, %v2728
    %v2731 = vld [vmem:[#allocation7] sm:$0xf]
    %v2732 = vld [vmem:[#allocation7 + $0x4] sm:$0xf]
    %v2733 = vld [vmem:[#allocation7 + $0x8] sm:$0xf]
    %v2734 = vld [vmem:[#allocation7 + $0xc] sm:$0xf]
    %v2735 = vld [vmem:[#allocation7 + $0x10] sm:$0xf]
    %v2736 = vld [vmem:[#allocation7 + $0x14] sm:$0xf]
    %v2737 = vld [vmem:[#allocation7 + $0x18] sm:$0xf]
    %v2738 = vld [vmem:[#allocation7 + $0x1c] sm:$0xf]
    %v2739 = vld [vmem:[#allocation7 + $0x20] sm:$0xf]
    %v2740 = vld [vmem:[#allocation7 + $0x24] sm:$0xf]
    %v2741 = vld [vmem:[#allocation7 + $0x28] sm:$0xf]
    %v2742 = vld [vmem:[#allocation7 + $0x2c] sm:$0xf]
    %v2743 = vld [vmem:[#allocation7 + $0x30] sm:$0xf]
    %v2744 = vld [vmem:[#allocation7 + $0x34] sm:$0xf]
    %v2745 = vld [vmem:[#allocation7 + $0x38] sm:$0xf]
    %v2746 = vld [vmem:[#allocation7 + $0x3c] sm:$0xf]
    %v2747 = vld [vmem:[%s12] sm:$0x1]
    %v2749 = vlaneseq
    %v2750 = vshrl.u32 %v2749, 7
    %v2751 = vsub.s32 0, %v2750
    %v2752 = vrot.slane %v2747, %v2751
    %v2770 = vunpack.c.l.b16 %v2731
    %v2771 = vunpack.c.l.b16 %v2732
    %v2772 = vunpack.c.l.b16 %v2733
    %v2773 = vunpack.c.l.b16 %v2734
    %v2774 = vunpack.c.l.b16 %v2735
    %v2775 = vunpack.c.l.b16 %v2736
    %v2776 = vunpack.c.l.b16 %v2737
    %v2777 = vunpack.c.l.b16 %v2738
    %v2778 = vunpack.c.l.b16 %v2739
    %v2779 = vunpack.c.l.b16 %v2740
    %v2780 = vunpack.c.l.b16 %v2741
    %v2781 = vunpack.c.l.b16 %v2742
    %v2782 = vunpack.c.l.b16 %v2743
    %v2783 = vunpack.c.l.b16 %v2744
    %v2784 = vunpack.c.l.b16 %v2745
    %v2785 = vunpack.c.l.b16 %v2746
    %v2786 = vpack.c.b16 %v2771, %v2770
    %v2787 = vpack.c.b16 %v2773, %v2772
    %v2788 = vpack.c.b16 %v2775, %v2774
    %v2789 = vpack.c.b16 %v2777, %v2776
    %v2790 = vpack.c.b16 %v2779, %v2778
    %v2791 = vpack.c.b16 %v2781, %v2780
    %v2792 = vpack.c.b16 %v2783, %v2782
    %v2793 = vpack.c.b16 %v2785, %v2784
    %2802 = vmatprep.subr.bf16.mxu0 0
    %2803 = vmatpush1.bf16.msra.mxu0 %v2786
    %2804 = vmatprep.subr.bf16.mxu0 0
    %2805 = vmatpush1.bf16.msra.mxu0 %v2787
    %2806 = vmatprep.subr.bf16.mxu0 0
    %2807 = vmatpush1.bf16.msra.mxu0 %v2788
    %2808 = vmatprep.subr.bf16.mxu0 0
    %2809 = vmatpush1.bf16.msra.mxu0 %v2789
    %2810 = vmatprep.subr.bf16.mxu0 0
    %2811 = vmatpush1.bf16.msra.mxu0 %v2790
    %2812 = vmatprep.subr.bf16.mxu0 0
    %2813 = vmatpush1.bf16.msra.mxu0 %v2791
    %2814 = vmatprep.subr.bf16.mxu0 0
    %2815 = vmatpush1.bf16.msra.mxu0 %v2792
    %2816 = vmatprep.subr.bf16.mxu0 0
    %2817 = vmatpush1.bf16.msra.mxu0 %v2793
    %2818 = vmatprep.subr.bf16.mxu0 0
    %2819 = vmatpush1.bf16.msra.mxu0 0
    %2820 = vmatprep.subr.bf16.mxu0 0
    %2821 = vmatpush1.bf16.msra.mxu0 0
    %2822 = vmatprep.subr.bf16.mxu0 0
    %2823 = vmatpush1.bf16.msra.mxu0 0
    %2824 = vmatprep.subr.bf16.mxu0 0
    %2825 = vmatpush1.bf16.msra.mxu0 0
    %2826 = vmatprep.subr.bf16.mxu0 0
    %2827 = vmatpush1.bf16.msra.mxu0 0
    %2828 = vmatprep.subr.bf16.mxu0 0
    %2829 = vmatpush1.bf16.msra.mxu0 0
    %2830 = vmatprep.subr.bf16.mxu0 0
    %2831 = vmatpush1.bf16.msra.mxu0 0
    %2832 = vmatprep.subr.bf16.mxu0 0
    %2833 = vmatpush1.bf16.msra.mxu0 0
    %2834 = vmatprep.mubr.bf16.mxu0 0
    %2835 = vmatmul.mubr.bf16.gmra.mrb[0].mxu0 %v2730
    %v2836 = vpop.f32.mrb[0].mxu0
    %v2837 = vadd.f32 %v2752, %v2836
    %v2838 = vpop.f32.mrb[0].mxu0
    %v2839 = vpop.f32.mrb[0].mxu0
    %v2840 = vadd.f32 %v2752, %v2839
    %v2841 = vpop.f32.mrb[0].mxu0
    %2842 = vdwg.mxu0
    %v2843 = vmax.f32 %v2837, 0.0
    %v2844 = vmax.f32 %v2840, 0.0
    %v2845 = vpack.c.bf16 %v2844, %v2843
    %v2847 = vunpack.c.l.b16 %v2845
    %v2848 = vunpack.c.h.b16 %v2845
    %v2849 = vpack.c.b16 %v2847, %v2847
    %v2850 = vpack.c.b16 %v2848, %v2848
    %2853 = vst [vmem:[%s13] sm:$0xf] %v2849
    %2854 = vst [vmem:[%s13 + $0x4] sm:$0xf] %v2850
    // Predicated region
    $region70: #{cmodel_forward.1} parent=1 // pred_check
      _
    $region71: #{cmodel_forward.1} parent=1 // pred_check_branch
      %2856 = sbr.rel (0) target = $region73
    $region72: #{cmodel_forward.1} parent=1 // pred_region
      _
    $region73: #{cmodel_forward.1} parent=1 // pred_fallthru
      _
    // Predicated region
    $region74: #{cmodel_forward.1} parent=1 // pred_check
      _
    $region75: #{cmodel_forward.1} parent=1 // pred_check_branch
      %2858 = sbr.rel (0) target = $region77
    $region76: #{cmodel_forward.1} parent=1 // pred_region
      _
    $region77: #{cmodel_forward.1} parent=1 // pred_fallthru
      _
    %2859 = vsyncpa [#allocation3], 1
    %2860 = vsyncpa [#allocation5], 1
    %2861 = vsyncpa [#allocation8], 1

</llo_original>
